<compile_context>
chip_gen: v7x
topology: tpu7x:2x2x1
jax: 0.10.0
libtpu: 0.0.40
codegen_flags: <defaults>
</compile_context>

<pallas_src>
import functools

import jax
import jax.numpy as jnp
from jax.experimental import pallas as pl
from jax.experimental.pallas import tpu as pltpu

LANE = 128


def _round_up(x, m):
    return ((x + m - 1) // m) * m


# ---------------------------------------------------------------------------
# Pallas kernel: per-query collision loss, tiled over (B, Np, Nv)
# ---------------------------------------------------------------------------
def _collision_kernel(pred_ref, verts_ref, normals_ref, tri_ref, out_ref,
                      cnt_ref, num_ref, den_ref, fnum_ref, fden_ref,
                      v0num_ref, v0den_ref, *,
                      thresh, radius, sample_num, eps, tnv):
    kv = pl.program_id(2)

    p = pred_ref[0].astype(jnp.float32)        # (TNp, 3)  query (garment) points
    vt = verts_ref[0].astype(jnp.float32)      # (3, TNv)  human vertices chunk
    nt = normals_ref[0].astype(jnp.float32)    # (3, TNv)  unit vertex normals chunk

    # pairwise query-support differences via rank-1 broadcasts (VPU)
    dx = p[:, 0:1] - vt[0:1, :]
    dy = p[:, 1:2] - vt[1:2, :]
    dz = p[:, 2:3] - vt[2:3, :]
    d2 = dx * dx + dy * dy + dz * dz                              # (TNp, TNv)
    dot = dx * nt[0:1, :] + dy * nt[1:2, :] + dz * nt[2:3, :]     # signed distance

    in_r = d2 < jnp.float32(radius * radius)                      # bool: ball-query hit
    vdot = dot - jnp.float32(thresh)
    # mask = (valid_dot < 0) with max_dist gating fused into one select
    neg = (dot >= jnp.float32(-radius)) & (vdot < 0.0)            # bool
    contrib = jnp.where(neg, vdot, 0.0)                           # = valid_dot * mask
    negf = neg.astype(jnp.float32)
    in_bf = in_r.astype(jnp.float32).astype(jnp.bfloat16)         # exact 0/1 for MXU

    @pl.when(kv == 0)
    def _init():
        z = jnp.zeros_like(cnt_ref)
        cnt_ref[...] = z
        num_ref[...] = z
        den_ref[...] = z
        fnum_ref[...] = z
        fden_ref[...] = z
        # vertex-0 fallback values (ball_query leaves idx==0 when no neighbor)
        v0num_ref[...] = contrib[:, 0:1]
        v0den_ref[...] = negf[:, 0:1]

    k = jnp.float32(sample_num)
    tri = tri_ref[...]                                            # (128,128) bf16 triu

    # blocked inclusive prefix-sum over 128-lane sub-chunks with carried count
    for j in range(tnv // LANE):
        sl = slice(j * LANE, (j + 1) * LANE)
        csum = cnt_ref[...] + jnp.dot(in_bf[:, sl], tri,
                                      preferred_element_type=jnp.float32)
        in_j = in_r[:, sl]
        selm = in_j & (csum <= k)            # first K in-radius (index order)
        firstm = in_j & (csum == 1.0)        # globally-first in-radius vertex
        c_j = contrib[:, sl]
        n_j = negf[:, sl]
        num_ref[...] += jnp.sum(jnp.where(selm, c_j, 0.0), axis=-1, keepdims=True)
        den_ref[...] += jnp.sum(jnp.where(selm, n_j, 0.0), axis=-1, keepdims=True)
        fnum_ref[...] += jnp.sum(jnp.where(firstm, c_j, 0.0), axis=-1, keepdims=True)
        fden_ref[...] += jnp.sum(jnp.where(firstm, n_j, 0.0), axis=-1, keepdims=True)
        cnt_ref[...] = csum[:, LANE - 1:LANE]  # running (uncapped) in-radius count

    @pl.when(kv == pl.num_programs(2) - 1)
    def _finalize():
        c = cnt_ref[...]
        extra = k - jnp.minimum(c, k)         # repeats of the first found vertex
        num = num_ref[...] + extra * fnum_ref[...]
        den = den_ref[...] + extra * fden_ref[...]
        has = c > 0.0
        num = jnp.where(has, num, k * v0num_ref[...])   # no neighbor -> K x vertex 0
        den = jnp.where(has, den, k * v0den_ref[...])
        loss = num / (den + jnp.float32(eps))
        out_ref[0] = (loss * loss).astype(out_ref.dtype)


def _collision_loss_map(pred, verts, v_normals, *, thresh, radius,
                        sample_num, eps):
    """pred (B,Np,3), verts (B,Nv,3), v_normals (B,Nv,3, unit) -> loss (B,Np)."""
    pred = pred.astype(jnp.float32)
    verts = verts.astype(jnp.float32)
    v_normals = v_normals.astype(jnp.float32)
    b, n_p, _ = pred.shape
    n_v = verts.shape[1]

    tnp_ = min(256, _round_up(n_p, 8))
    np_pad = _round_up(n_p, tnp_)
    tnv = min(512, _round_up(n_v, LANE))
    nv_pad = _round_up(n_v, tnv)

    if np_pad != n_p:
        pred = jnp.pad(pred, ((0, 0), (0, np_pad - n_p), (0, 0)),
                       constant_values=1e6)
    if nv_pad != n_v:
        # sentinel vertices far away: never inside the query radius
        verts = jnp.pad(verts, ((0, 0), (0, nv_pad - n_v), (0, 0)),
                        constant_values=1e6)
        v_normals = jnp.pad(v_normals, ((0, 0), (0, nv_pad - n_v), (0, 0)),
                            constant_values=0.0)

    verts_t = jnp.swapaxes(verts, -1, -2)        # (B, 3, Nv_pad)
    normals_t = jnp.swapaxes(v_normals, -1, -2)  # (B, 3, Nv_pad)
    tri = jnp.triu(jnp.ones((LANE, LANE), dtype=jnp.bfloat16))  # prefix-sum constant

    kernel = functools.partial(
        _collision_kernel, thresh=float(thresh), radius=float(radius),
        sample_num=int(sample_num), eps=float(eps), tnv=tnv)

    grid = (b, np_pad // tnp_, nv_pad // tnv)
    flops = 2.0 * b * np_pad * nv_pad * LANE + 24.0 * b * np_pad * nv_pad
    bytes_accessed = (pred.size + 2 * verts_t.size + b * np_pad) * 4 + tri.size * 2
    cost = pl.CostEstimate(flops=int(flops), transcendentals=0,
                           bytes_accessed=int(bytes_accessed))

    out = pl.pallas_call(
        kernel,
        out_shape=jax.ShapeDtypeStruct((b, np_pad, 1), jnp.float32),
        grid_spec=pltpu.PrefetchScalarGridSpec(
            num_scalar_prefetch=0,
            grid=grid,
            in_specs=[
                pl.BlockSpec((1, tnp_, 3), lambda bi, i, kv: (bi, i, 0)),
                pl.BlockSpec((1, 3, tnv), lambda bi, i, kv: (bi, 0, kv)),
                pl.BlockSpec((1, 3, tnv), lambda bi, i, kv: (bi, 0, kv)),
                pl.BlockSpec((LANE, LANE), lambda bi, i, kv: (0, 0)),  # resident const
            ],
            out_specs=pl.BlockSpec((1, tnp_, 1), lambda bi, i, kv: (bi, i, 0)),
            scratch_shapes=[pltpu.VMEM((tnp_, 1), jnp.float32)] * 7,
        ),
        compiler_params=pltpu.CompilerParams(
            dimension_semantics=("parallel", "parallel", "arbitrary"),
            vmem_limit_bytes=32 * 1024 * 1024),
        cost_estimate=cost,
    )(pred, verts_t, normals_t, tri)
    return out[:, :n_p, 0]                                        # (B, Np)


# ---------------------------------------------------------------------------
# JAX glue (mesh normals, mask averaging, final reduction)
# ---------------------------------------------------------------------------
def _face_normals_batched(verts, faces, eps):
    # verts: (B, Nv, 3) f32, faces: (B, Nf, 3) int32
    def one(v, f):
        v0, v1, v2 = v[f[:, 0]], v[f[:, 1]], v[f[:, 2]]
        n = jnp.cross(v1 - v0, v2 - v0)
        # TODO(synk): face_normals_batched source not provided; assuming unit face normals.
        return n / (jnp.linalg.norm(n, axis=-1, keepdims=True) + eps)
    return jax.vmap(one)(verts, faces)


def collision_error(pred, label, h_state, h_faces, h_v2f_mask, thresh, max_dist,
                    weight=None, reduction='sum', avg_factor=None,
                    sample_num=4, eps=1e-7, **kwargs):
    # h_v2f_mask: dense (B, Nv, Nf) 0/1 incidence mask.
    # TODO(synk): reference builds a torch.sparse_coo_tensor; dense mask used here.
    human_faces = jnp.swapaxes(h_faces, -1, -2).astype(jnp.int32)              # (B, Nf, 3)
    human_verts = jnp.swapaxes(h_state, -1, -2)[..., :3].astype(jnp.float32)   # (B, Nv, 3)

    f_normals = _face_normals_batched(human_verts, human_faces, eps)           # (B, Nf, 3)
    deg = jnp.sum(h_v2f_mask, axis=-1, keepdims=True)                          # (B, Nv, 1)
    v_normals = jnp.einsum('bvf,bfc->bvc', h_v2f_mask.astype(jnp.float32),
                           f_normals) / (deg + eps)
    # reference normalizes the grouped normals per vertex (norm + eps); identical here
    v_normals = v_normals / (jnp.linalg.norm(v_normals, axis=-1, keepdims=True) + eps)

    loss_map = _collision_loss_map(
        pred.astype(jnp.float32), human_verts, v_normals,
        thresh=thresh, radius=max_dist, sample_num=sample_num, eps=eps)        # (B, Np)

    avg_count = jnp.sum((loss_map > 0).astype(jnp.float32))
    if weight is not None:
        loss_map = loss_map * weight.astype(jnp.float32)
    if reduction == 'sum':
        loss = jnp.sum(loss_map)
    elif reduction == 'mean':
        loss = (jnp.mean(loss_map) if avg_factor is None
                else jnp.sum(loss_map) / avg_factor)
    else:  # 'none'
        loss = loss_map
    return loss / (avg_count + eps)


class CollisionLoss:
    """JAX/Pallas port of CollisionLoss (no learnable parameters)."""

    def __init__(self, reduction='sum', loss_weight=1.0, per_garment=False,
                 per_garment_weight=1.0, loss_name='loss_collision',
                 thresh=0.001, radius=0.01, min_radius=0.0, sample_num=4,
                 use_xyz=False, normalize_xyz=False, return_grouped_xyz=True,
                 return_grouped_idx=False, return_unique_cnt=False):
        assert min_radius == 0.0 and not use_xyz and not normalize_xyz
        self.reduction = reduction
        self.loss_weight = loss_weight
        self.per_garment = per_garment
        self.per_garment_weight = per_garment_weight
        self.thresh = thresh
        self.radius = radius
        self.sample_num = sample_num
        self._loss_name = loss_name

    def __call__(self, cls_score, label, weight=None, avg_factor=None,
                 reduction_override=None, **kwargs):
        assert reduction_override in (None, 'none', 'mean', 'sum')
        reduction = reduction_override if reduction_override else self.reduction
        if self.loss_weight == 0:
            return 0
        loss = self.loss_weight * collision_error(
            cls_score, label, weight=weight, reduction=reduction,
            avg_factor=avg_factor, thresh=self.thresh, max_dist=self.radius,
            sample_num=self.sample_num, **kwargs)
        # TODO(synk): per_garment branch (garment_wise_collision_error) not implemented.
        return loss

    @property
    def loss_name(self):
        return self._loss_name


# ---------------------------------------------------------------------------
if __name__ == "__main__":
    key = jax.random.PRNGKey(0)
    B, n_v, n_p, n_f, C = 2, 64, 64, 96, 6
    k1, k2, k3, k4 = jax.random.split(key, 4)

    # human mesh state: (B, C, Nv), first 3 channels are xyz
    verts = jax.random.normal(k1, (B, n_v, 3), jnp.float32) * 0.05
    extra = jax.random.normal(k2, (B, C - 3, n_v), jnp.float32)
    h_state = jnp.concatenate([jnp.swapaxes(verts, -1, -2), extra], axis=1)

    # faces: (B, 3, Nf) int (reference transposes to (B, Nf, 3))
    base = jax.random.randint(k3, (B, n_f), 0, n_v)
    faces = jnp.stack([base, (base + 1) % n_v, (base + 2) % n_v], axis=-1)  # (B, Nf, 3)
    h_faces = jnp.swapaxes(faces, -1, -2)

    # dense vertex-to-face incidence mask (B, Nv, Nf)
    one_hot = jax.nn.one_hot(faces, n_v, dtype=jnp.float32)                  # (B, Nf, 3, Nv)
    h_v2f_mask = jnp.swapaxes(jnp.clip(jnp.sum(one_hot, axis=2), 0.0, 1.0), -1, -2)

    # predicted garment points near the human surface so the ball query fires
    pred = verts[:, :n_p] + 0.004 * jax.random.normal(k4, (B, n_p, 3), jnp.float32)
    label = jnp.zeros_like(pred)

    loss_fn = CollisionLoss()
    loss = loss_fn(pred, label, h_state=h_state, h_faces=h_faces,
                   h_v2f_mask=h_v2f_mask)
    loss = jax.block_until_ready(loss)
    print("KERNEL_OK")
</pallas_src>

<mosaic_0001>
module attributes {stable_mosaic.version = 11 : i64} {
  func.func @_collision_kernel(%arg0: i32, %arg1: i32, %arg2: i32, %arg3: memref<1x64x3xf32, #tpu.memory_space<vmem>>, %arg4: memref<1x3x128xf32, #tpu.memory_space<vmem>>, %arg5: memref<1x3x128xf32, #tpu.memory_space<vmem>>, %arg6: memref<128x128xbf16, #tpu.memory_space<vmem>>, %arg7: memref<1x64x1xf32, #tpu.memory_space<vmem>>, %arg8: memref<64x1xf32, #tpu.memory_space<vmem>>, %arg9: memref<64x1xf32, #tpu.memory_space<vmem>>, %arg10: memref<64x1xf32, #tpu.memory_space<vmem>>, %arg11: memref<64x1xf32, #tpu.memory_space<vmem>>, %arg12: memref<64x1xf32, #tpu.memory_space<vmem>>, %arg13: memref<64x1xf32, #tpu.memory_space<vmem>>, %arg14: memref<64x1xf32, #tpu.memory_space<vmem>>) attributes {dimension_semantics = [#tpu.dimension_semantics<parallel>, #tpu.dimension_semantics<parallel>, #tpu.dimension_semantics<arbitrary>], iteration_bounds = array<i64: 2, 1, 1>, scalar_prefetch = 0 : i64, scratch_operands = 7 : i64, tpu.core_type = #tpu.core_type<tc>, window_params = [{transform_indices = @transform_0, window_bounds = array<i64: 1, 64, 3>}, {transform_indices = @transform_1, window_bounds = array<i64: 1, 3, 128>}, {transform_indices = @transform_2, window_bounds = array<i64: 1, 3, 128>}, {pipeline_mode = #tpu.pipeline_mode<synchronous>, transform_indices = @transform_3, window_bounds = array<i64: 128, 128>}, {transform_indices = @transform_4, window_bounds = array<i64: 1, 64, 1>}]} {
    %c0 = arith.constant 0 : index
    %c0_0 = arith.constant 0 : index
    %c0_1 = arith.constant 0 : index
    %0 = vector.load %arg3[%c0, %c0_0, %c0_1] : memref<1x64x3xf32, #tpu.memory_space<vmem>>, vector<1x64x3xf32>
    %1 = vector.shape_cast %0 : vector<1x64x3xf32> to vector<64x3xf32>
    %c0_2 = arith.constant 0 : index
    %c0_3 = arith.constant 0 : index
    %c0_4 = arith.constant 0 : index
    %2 = vector.load %arg4[%c0_2, %c0_3, %c0_4] : memref<1x3x128xf32, #tpu.memory_space<vmem>>, vector<1x3x128xf32>
    %3 = vector.shape_cast %2 : vector<1x3x128xf32> to vector<3x128xf32>
    %c0_5 = arith.constant 0 : index
    %c0_6 = arith.constant 0 : index
    %c0_7 = arith.constant 0 : index
    %4 = vector.load %arg5[%c0_5, %c0_6, %c0_7] : memref<1x3x128xf32, #tpu.memory_space<vmem>>, vector<1x3x128xf32>
    %5 = vector.shape_cast %4 : vector<1x3x128xf32> to vector<3x128xf32>
    %6 = vector.extract_strided_slice %1 {offsets = [0, 0], sizes = [64, 1], strides = [1, 1]} : vector<64x3xf32> to vector<64x1xf32>
    %7 = vector.extract_strided_slice %3 {offsets = [0, 0], sizes = [1, 128], strides = [1, 1]} : vector<3x128xf32> to vector<1x128xf32>
    %8 = vector.broadcast %6 : vector<64x1xf32> to vector<64x128xf32>
    %9 = vector.broadcast %7 : vector<1x128xf32> to vector<64x128xf32>
    %10 = arith.subf %8, %9 : vector<64x128xf32>
    %11 = vector.extract_strided_slice %1 {offsets = [0, 1], sizes = [64, 1], strides = [1, 1]} : vector<64x3xf32> to vector<64x1xf32>
    %12 = vector.extract_strided_slice %3 {offsets = [1, 0], sizes = [1, 128], strides = [1, 1]} : vector<3x128xf32> to vector<1x128xf32>
    %13 = vector.broadcast %11 : vector<64x1xf32> to vector<64x128xf32>
    %14 = vector.broadcast %12 : vector<1x128xf32> to vector<64x128xf32>
    %15 = arith.subf %13, %14 : vector<64x128xf32>
    %16 = vector.extract_strided_slice %1 {offsets = [0, 2], sizes = [64, 1], strides = [1, 1]} : vector<64x3xf32> to vector<64x1xf32>
    %17 = vector.extract_strided_slice %3 {offsets = [2, 0], sizes = [1, 128], strides = [1, 1]} : vector<3x128xf32> to vector<1x128xf32>
    %18 = vector.broadcast %16 : vector<64x1xf32> to vector<64x128xf32>
    %19 = vector.broadcast %17 : vector<1x128xf32> to vector<64x128xf32>
    %20 = arith.subf %18, %19 : vector<64x128xf32>
    %21 = arith.mulf %10, %10 : vector<64x128xf32>
    %22 = arith.mulf %15, %15 : vector<64x128xf32>
    %23 = arith.addf %21, %22 : vector<64x128xf32>
    %24 = arith.mulf %20, %20 : vector<64x128xf32>
    %25 = arith.addf %23, %24 : vector<64x128xf32>
    %26 = vector.extract_strided_slice %5 {offsets = [0, 0], sizes = [1, 128], strides = [1, 1]} : vector<3x128xf32> to vector<1x128xf32>
    %27 = vector.broadcast %26 : vector<1x128xf32> to vector<64x128xf32>
    %28 = arith.mulf %10, %27 : vector<64x128xf32>
    %29 = vector.extract_strided_slice %5 {offsets = [1, 0], sizes = [1, 128], strides = [1, 1]} : vector<3x128xf32> to vector<1x128xf32>
    %30 = vector.broadcast %29 : vector<1x128xf32> to vector<64x128xf32>
    %31 = arith.mulf %15, %30 : vector<64x128xf32>
    %32 = arith.addf %28, %31 : vector<64x128xf32>
    %33 = vector.extract_strided_slice %5 {offsets = [2, 0], sizes = [1, 128], strides = [1, 1]} : vector<3x128xf32> to vector<1x128xf32>
    %34 = vector.broadcast %33 : vector<1x128xf32> to vector<64x128xf32>
    %35 = arith.mulf %20, %34 : vector<64x128xf32>
    %36 = arith.addf %32, %35 : vector<64x128xf32>
    %cst = arith.constant 9.99999974E-5 : f32
    %37 = vector.broadcast %cst : f32 to vector<64x128xf32>
    %38 = arith.cmpf olt, %25, %37 : vector<64x128xf32>
    %cst_8 = arith.constant 1.000000e-03 : f32
    %39 = vector.broadcast %cst_8 : f32 to vector<64x128xf32>
    %40 = arith.subf %36, %39 : vector<64x128xf32>
    %cst_9 = arith.constant -0.00999999977 : f32
    %41 = vector.broadcast %cst_9 : f32 to vector<64x128xf32>
    %42 = arith.cmpf oge, %36, %41 : vector<64x128xf32>
    %cst_10 = arith.constant 0.000000e+00 : f32
    %43 = vector.broadcast %cst_10 : f32 to vector<64x128xf32>
    %44 = arith.cmpf olt, %40, %43 : vector<64x128xf32>
    %45 = arith.andi %42, %44 : vector<64x128xi1>
    %cst_11 = arith.constant 0.000000e+00 : f32
    %46 = vector.broadcast %cst_11 : f32 to vector<64x128xf32>
    %47 = arith.select %45, %40, %46 : vector<64x128xi1>, vector<64x128xf32>
    %48 = arith.extui %45 : vector<64x128xi1> to vector<64x128xi32>
    %49 = arith.sitofp %48 : vector<64x128xi32> to vector<64x128xf32>
    %50 = arith.extui %38 : vector<64x128xi1> to vector<64x128xi32>
    %51 = arith.sitofp %50 : vector<64x128xi32> to vector<64x128xf32>
    %52 = arith.truncf %51 : vector<64x128xf32> to vector<64x128xbf16>
    %c0_i32 = arith.constant 0 : i32
    %53 = arith.cmpi eq, %arg2, %c0_i32 : i32
    %54 = arith.extui %53 : i1 to i32
    %c0_i32_12 = arith.constant 0 : i32
    %55 = arith.cmpi ne, %54, %c0_i32_12 : i32
    scf.if %55 {
      %cst_49 = arith.constant 0.000000e+00 : f32
      %100 = vector.broadcast %cst_49 : f32 to vector<64x1xf32>
      %c0_50 = arith.constant 0 : index
      %c0_51 = arith.constant 0 : index
      %101 = vector.load %arg8[%c0_50, %c0_51] : memref<64x1xf32, #tpu.memory_space<vmem>>, vector<64x1xf32>
      tpu.vector_store %arg8[%c0_50, %c0_51], %100 {strides = array<i32>} : memref<64x1xf32, #tpu.memory_space<vmem>>, vector<64x1xf32>,
      %c0_52 = arith.constant 0 : index
      %c0_53 = arith.constant 0 : index
      %102 = vector.load %arg9[%c0_52, %c0_53] : memref<64x1xf32, #tpu.memory_space<vmem>>, vector<64x1xf32>
      tpu.vector_store %arg9[%c0_52, %c0_53], %100 {strides = array<i32>} : memref<64x1xf32, #tpu.memory_space<vmem>>, vector<64x1xf32>,
      %c0_54 = arith.constant 0 : index
      %c0_55 = arith.constant 0 : index
      %103 = vector.load %arg10[%c0_54, %c0_55] : memref<64x1xf32, #tpu.memory_space<vmem>>, vector<64x1xf32>
      tpu.vector_store %arg10[%c0_54, %c0_55], %100 {strides = array<i32>} : memref<64x1xf32, #tpu.memory_space<vmem>>, vector<64x1xf32>,
      %c0_56 = arith.constant 0 : index
      %c0_57 = arith.constant 0 : index
      %104 = vector.load %arg11[%c0_56, %c0_57] : memref<64x1xf32, #tpu.memory_space<vmem>>, vector<64x1xf32>
      tpu.vector_store %arg11[%c0_56, %c0_57], %100 {strides = array<i32>} : memref<64x1xf32, #tpu.memory_space<vmem>>, vector<64x1xf32>,
      %c0_58 = arith.constant 0 : index
      %c0_59 = arith.constant 0 : index
      %105 = vector.load %arg12[%c0_58, %c0_59] : memref<64x1xf32, #tpu.memory_space<vmem>>, vector<64x1xf32>
      tpu.vector_store %arg12[%c0_58, %c0_59], %100 {strides = array<i32>} : memref<64x1xf32, #tpu.memory_space<vmem>>, vector<64x1xf32>,
      %106 = vector.extract_strided_slice %47 {offsets = [0, 0], sizes = [64, 1], strides = [1, 1]} : vector<64x128xf32> to vector<64x1xf32>
      %c0_60 = arith.constant 0 : index
      %c0_61 = arith.constant 0 : index
      %107 = vector.load %arg13[%c0_60, %c0_61] : memref<64x1xf32, #tpu.memory_space<vmem>>, vector<64x1xf32>
      tpu.vector_store %arg13[%c0_60, %c0_61], %106 {strides = array<i32>} : memref<64x1xf32, #tpu.memory_space<vmem>>, vector<64x1xf32>,
      %108 = vector.extract_strided_slice %49 {offsets = [0, 0], sizes = [64, 1], strides = [1, 1]} : vector<64x128xf32> to vector<64x1xf32>
      %c0_62 = arith.constant 0 : index
      %c0_63 = arith.constant 0 : index
      %109 = vector.load %arg14[%c0_62, %c0_63] : memref<64x1xf32, #tpu.memory_space<vmem>>, vector<64x1xf32>
      tpu.vector_store %arg14[%c0_62, %c0_63], %108 {strides = array<i32>} : memref<64x1xf32, #tpu.memory_space<vmem>>, vector<64x1xf32>,
    } else {
    }
    %c0_13 = arith.constant 0 : index
    %c0_14 = arith.constant 0 : index
    %56 = vector.load %arg6[%c0_13, %c0_14] : memref<128x128xbf16, #tpu.memory_space<vmem>>, vector<128x128xbf16>
    %c0_15 = arith.constant 0 : index
    %c0_16 = arith.constant 0 : index
    %57 = vector.load %arg8[%c0_15, %c0_16] : memref<64x1xf32, #tpu.memory_space<vmem>>, vector<64x1xf32>
    %cst_17 = arith.constant dense<0.000000e+00> : vector<64x128xf32>
    %58 = tpu.matmul %52, %56, %cst_17 {dimension_numbers = #tpu.dot_dimension_numbers<[1], [0], [0], [1], [0, 0, 1, 1], [], []>} : vector<64x128xbf16>, vector<128x128xbf16>, vector<64x128xf32> -> vector<64x128xf32>
    %59 = vector.broadcast %57 : vector<64x1xf32> to vector<64x128xf32>
    %60 = arith.addf %59, %58 : vector<64x128xf32>
    %cst_18 = arith.constant 4.000000e+00 : f32
    %61 = vector.broadcast %cst_18 : f32 to vector<64x128xf32>
    %62 = arith.cmpf ole, %60, %61 : vector<64x128xf32>
    %63 = arith.andi %38, %62 : vector<64x128xi1>
    %cst_19 = arith.constant 1.000000e+00 : f32
    %64 = vector.broadcast %cst_19 : f32 to vector<64x128xf32>
    %65 = arith.cmpf oeq, %60, %64 : vector<64x128xf32>
    %66 = arith.andi %38, %65 : vector<64x128xi1>
    %c0_20 = arith.constant 0 : index
    %c0_21 = arith.constant 0 : index
    %67 = vector.load %arg9[%c0_20, %c0_21] : memref<64x1xf32, #tpu.memory_space<vmem>>, vector<64x1xf32>
    %cst_22 = arith.constant 0.000000e+00 : f32
    %68 = vector.broadcast %cst_22 : f32 to vector<64x128xf32>
    %69 = arith.select %63, %47, %68 : vector<64x128xi1>, vector<64x128xf32>
    %cst_23 = arith.constant dense<0.000000e+00> : vector<64xf32>
    %70 = vector.multi_reduction <add>, %69, %cst_23 [1] : vector<64x128xf32> to vector<64xf32>
    %71 = vector.shape_cast %70 : vector<64xf32> to vector<64x1xf32>
    %72 = arith.addf %67, %71 : vector<64x1xf32>
    %c0_24 = arith.constant 0 : index
    %c0_25 = arith.constant 0 : index
    %73 = vector.load %arg9[%c0_24, %c0_25] : memref<64x1xf32, #tpu.memory_space<vmem>>, vector<64x1xf32>
    tpu.vector_store %arg9[%c0_24, %c0_25], %72 {strides = array<i32>} : memref<64x1xf32, #tpu.memory_space<vmem>>, vector<64x1xf32>,
    %c0_26 = arith.constant 0 : index
    %c0_27 = arith.constant 0 : index
    %74 = vector.load %arg10[%c0_26, %c0_27] : memref<64x1xf32, #tpu.memory_space<vmem>>, vector<64x1xf32>
    %cst_28 = arith.constant 0.000000e+00 : f32
    %75 = vector.broadcast %cst_28 : f32 to vector<64x128xf32>
    %76 = arith.select %63, %49, %75 : vector<64x128xi1>, vector<64x128xf32>
    %cst_29 = arith.constant dense<0.000000e+00> : vector<64xf32>
    %77 = vector.multi_reduction <add>, %76, %cst_29 [1] : vector<64x128xf32> to vector<64xf32>
    %78 = vector.shape_cast %77 : vector<64xf32> to vector<64x1xf32>
    %79 = arith.addf %74, %78 : vector<64x1xf32>
    %c0_30 = arith.constant 0 : index
    %c0_31 = arith.constant 0 : index
    %80 = vector.load %arg10[%c0_30, %c0_31] : memref<64x1xf32, #tpu.memory_space<vmem>>, vector<64x1xf32>
    tpu.vector_store %arg10[%c0_30, %c0_31], %79 {strides = array<i32>} : memref<64x1xf32, #tpu.memory_space<vmem>>, vector<64x1xf32>,
    %c0_32 = arith.constant 0 : index
    %c0_33 = arith.constant 0 : index
    %81 = vector.load %arg11[%c0_32, %c0_33] : memref<64x1xf32, #tpu.memory_space<vmem>>, vector<64x1xf32>
    %cst_34 = arith.constant 0.000000e+00 : f32
    %82 = vector.broadcast %cst_34 : f32 to vector<64x128xf32>
    %83 = arith.select %66, %47, %82 : vector<64x128xi1>, vector<64x128xf32>
    %cst_35 = arith.constant dense<0.000000e+00> : vector<64xf32>
    %84 = vector.multi_reduction <add>, %83, %cst_35 [1] : vector<64x128xf32> to vector<64xf32>
    %85 = vector.shape_cast %84 : vector<64xf32> to vector<64x1xf32>
    %86 = arith.addf %81, %85 : vector<64x1xf32>
    %c0_36 = arith.constant 0 : index
    %c0_37 = arith.constant 0 : index
    %87 = vector.load %arg11[%c0_36, %c0_37] : memref<64x1xf32, #tpu.memory_space<vmem>>, vector<64x1xf32>
    tpu.vector_store %arg11[%c0_36, %c0_37], %86 {strides = array<i32>} : memref<64x1xf32, #tpu.memory_space<vmem>>, vector<64x1xf32>,
    %c0_38 = arith.constant 0 : index
    %c0_39 = arith.constant 0 : index
    %88 = vector.load %arg12[%c0_38, %c0_39] : memref<64x1xf32, #tpu.memory_space<vmem>>, vector<64x1xf32>
    %cst_40 = arith.constant 0.000000e+00 : f32
    %89 = vector.broadcast %cst_40 : f32 to vector<64x128xf32>
    %90 = arith.select %66, %49, %89 : vector<64x128xi1>, vector<64x128xf32>
    %cst_41 = arith.constant dense<0.000000e+00> : vector<64xf32>
    %91 = vector.multi_reduction <add>, %90, %cst_41 [1] : vector<64x128xf32> to vector<64xf32>
    %92 = vector.shape_cast %91 : vector<64xf32> to vector<64x1xf32>
    %93 = arith.addf %88, %92 : vector<64x1xf32>
    %c0_42 = arith.constant 0 : index
    %c0_43 = arith.constant 0 : index
    %94 = vector.load %arg12[%c0_42, %c0_43] : memref<64x1xf32, #tpu.memory_space<vmem>>, vector<64x1xf32>
    tpu.vector_store %arg12[%c0_42, %c0_43], %93 {strides = array<i32>} : memref<64x1xf32, #tpu.memory_space<vmem>>, vector<64x1xf32>,
    %95 = vector.extract_strided_slice %60 {offsets = [0, 127], sizes = [64, 1], strides = [1, 1]} : vector<64x128xf32> to vector<64x1xf32>
    %c0_44 = arith.constant 0 : index
    %c0_45 = arith.constant 0 : index
    %96 = vector.load %arg8[%c0_44, %c0_45] : memref<64x1xf32, #tpu.memory_space<vmem>>, vector<64x1xf32>
    tpu.vector_store %arg8[%c0_44, %c0_45], %95 {strides = array<i32>} : memref<64x1xf32, #tpu.memory_space<vmem>>, vector<64x1xf32>,
    %c0_i32_46 = arith.constant 0 : i32
    %97 = arith.cmpi eq, %arg2, %c0_i32_46 : i32
    %98 = arith.extui %97 : i1 to i32
    %cst_47 = arith.constant 4.000000e+00 : f32
    %c0_i32_48 = arith.constant 0 : i32
    %99 = arith.cmpi ne, %98, %c0_i32_48 : i32
    scf.if %99 {
      %c0_49 = arith.constant 0 : index
      %c0_50 = arith.constant 0 : index
      %100 = vector.load %arg8[%c0_49, %c0_50] : memref<64x1xf32, #tpu.memory_space<vmem>>, vector<64x1xf32>
      %101 = vector.broadcast %cst_47 : f32 to vector<64x1xf32>
      %102 = arith.minimumf %100, %101 : vector<64x1xf32>
      %103 = vector.broadcast %cst_47 : f32 to vector<64x1xf32>
      %104 = arith.subf %103, %102 : vector<64x1xf32>
      %c0_51 = arith.constant 0 : index
      %c0_52 = arith.constant 0 : index
      %105 = vector.load %arg9[%c0_51, %c0_52] : memref<64x1xf32, #tpu.memory_space<vmem>>, vector<64x1xf32>
      %c0_53 = arith.constant 0 : index
      %c0_54 = arith.constant 0 : index
      %106 = vector.load %arg11[%c0_53, %c0_54] : memref<64x1xf32, #tpu.memory_space<vmem>>, vector<64x1xf32>
      %107 = arith.mulf %104, %106 : vector<64x1xf32>
      %108 = arith.addf %105, %107 : vector<64x1xf32>
      %c0_55 = arith.constant 0 : index
      %c0_56 = arith.constant 0 : index
      %109 = vector.load %arg10[%c0_55, %c0_56] : memref<64x1xf32, #tpu.memory_space<vmem>>, vector<64x1xf32>
      %c0_57 = arith.constant 0 : index
      %c0_58 = arith.constant 0 : index
      %110 = vector.load %arg12[%c0_57, %c0_58] : memref<64x1xf32, #tpu.memory_space<vmem>>, vector<64x1xf32>
      %111 = arith.mulf %104, %110 : vector<64x1xf32>
      %112 = arith.addf %109, %111 : vector<64x1xf32>
      %cst_59 = arith.constant 0.000000e+00 : f32
      %113 = vector.broadcast %cst_59 : f32 to vector<64x1xf32>
      %114 = arith.cmpf ogt, %100, %113 : vector<64x1xf32>
      %c0_60 = arith.constant 0 : index
      %c0_61 = arith.constant 0 : index
      %115 = vector.load %arg13[%c0_60, %c0_61] : memref<64x1xf32, #tpu.memory_space<vmem>>, vector<64x1xf32>
      %116 = vector.broadcast %cst_47 : f32 to vector<64x1xf32>
      %117 = arith.mulf %116, %115 : vector<64x1xf32>
      %118 = arith.select %114, %108, %117 : vector<64x1xi1>, vector<64x1xf32>
      %c0_62 = arith.constant 0 : index
      %c0_63 = arith.constant 0 : index
      %119 = vector.load %arg14[%c0_62, %c0_63] : memref<64x1xf32, #tpu.memory_space<vmem>>, vector<64x1xf32>
      %120 = vector.broadcast %cst_47 : f32 to vector<64x1xf32>
      %121 = arith.mulf %120, %119 : vector<64x1xf32>
      %122 = arith.select %114, %112, %121 : vector<64x1xi1>, vector<64x1xf32>
      %cst_64 = arith.constant 1.000000e-07 : f32
      %123 = vector.broadcast %cst_64 : f32 to vector<64x1xf32>
      %124 = arith.addf %122, %123 : vector<64x1xf32>
      %125 = arith.divf %118, %124 : vector<64x1xf32>
      %126 = arith.mulf %125, %125 : vector<64x1xf32>
      %c0_65 = arith.constant 0 : index
      %c0_66 = arith.constant 0 : index
      %c0_67 = arith.constant 0 : index
      %127 = vector.load %arg7[%c0_65, %c0_66, %c0_67] : memref<1x64x1xf32, #tpu.memory_space<vmem>>, vector<1x64x1xf32>
      %128 = vector.shape_cast %127 : vector<1x64x1xf32> to vector<64x1xf32>
      %129 = vector.shape_cast %126 : vector<64x1xf32> to vector<1x64x1xf32>
      tpu.vector_store %arg7[%c0_65, %c0_66, %c0_67], %129 {strides = array<i32>} : memref<1x64x1xf32, #tpu.memory_space<vmem>>, vector<1x64x1xf32>,
    } else {
    }
    return
  }
  func.func @transform_0(%arg0: i32, %arg1: i32, %arg2: i32) -> (i32, i32, i32) {
    %c0_i32 = arith.constant 0 : i32
    %c0_i32_0 = arith.constant 0 : i32
    return %arg0, %arg1, %c0_i32 : i32, i32, i32
  }
  func.func @transform_1(%arg0: i32, %arg1: i32, %arg2: i32) -> (i32, i32, i32) {
    %c0_i32 = arith.constant 0 : i32
    %c0_i32_0 = arith.constant 0 : i32
    return %arg0, %c0_i32, %arg2 : i32, i32, i32
  }
  func.func @transform_2(%arg0: i32, %arg1: i32, %arg2: i32) -> (i32, i32, i32) {
    %c0_i32 = arith.constant 0 : i32
    %c0_i32_0 = arith.constant 0 : i32
    return %arg0, %c0_i32, %arg2 : i32, i32, i32
  }
  func.func @transform_3(%arg0: i32, %arg1: i32, %arg2: i32) -> (i32, i32) {
    %c0_i32 = arith.constant 0 : i32
    %c0_i32_0 = arith.constant 0 : i32
    %c0_i32_1 = arith.constant 0 : i32
    return %c0_i32, %c0_i32_0 : i32, i32
  }
  func.func @transform_4(%arg0: i32, %arg1: i32, %arg2: i32) -> (i32, i32, i32) {
    %c0_i32 = arith.constant 0 : i32
    %c0_i32_0 = arith.constant 0 : i32
    return %arg0, %arg1, %c0_i32 : i32, i32, i32
  }
}

</mosaic_0001>

<llo_original>
// kernel: tpu_custom_call.1
$region0: #{tpu_custom_call.1}
  #allocation0 [shape = 'u32[]', space=smem, size = 0x4, offset = 0x4, fixed_abs, tag = 'smem constant byte address 0x4 - core index']
  #allocation1 [shape = 'u32[144,128]{1,0:T(1,128)}', space=vmem, size = 0x12000, scoped, tag = 'internal scratch']
  #allocation2 [shape = 'f32[64,1]{1,0:T(8,128)}', space=vmem, size = 0x8000, scoped, tag = 'scratch operand']
  #allocation3 [shape = 'f32[64,1]{1,0:T(8,128)}', space=vmem, size = 0x8000, scoped, tag = 'scratch operand']
  #allocation4 [shape = 'f32[64,1]{1,0:T(8,128)}', space=vmem, size = 0x8000, scoped, tag = 'scratch operand']
  #allocation5 [shape = 'f32[64,1]{1,0:T(8,128)}', space=vmem, size = 0x8000, scoped, tag = 'scratch operand']
  #allocation6 [shape = 'f32[64,1]{1,0:T(8,128)}', space=vmem, size = 0x8000, scoped, tag = 'scratch operand']
  #allocation7 [shape = 'f32[64,1]{1,0:T(8,128)}', space=vmem, size = 0x8000, scoped, tag = 'scratch operand']
  #allocation8 [shape = 'f32[64,1]{1,0:T(8,128)}', space=vmem, size = 0x8000, scoped, tag = 'scratch operand']
  %s0 = inlined_call_operand.vmem [shape: f32[2,64,3], index: 0, kind: input, shape index: {}]
  %s1 = inlined_call_operand.vmem [shape: f32[2,3,128], index: 1, kind: input, shape index: {}]
  %s2 = inlined_call_operand.vmem [shape: f32[2,3,128], index: 2, kind: input, shape index: {}]
  %s3 = inlined_call_operand.vmem [shape: bf16[128,128], index: 3, kind: input, shape index: {}]
  %s4 = inlined_call_operand.vmem [shape: f32[2,64,1], index: 4, kind: output, shape index: {}]
  %s5 = sld [smem:[#allocation0]]
  $region57: #{tpu_custom_call.1} parent=0
    _
  %s7 = ssub.s32 1, %s5
  %s8 = scalar_select 0, %s7, %s5
  loop: start=0, step=1, limit=4
  $region2: #{tpu_custom_call.1} parent=0 // loop_pre_header
    _
  $region3: #{tpu_custom_call.1} parent=0 // loop_header
    %s10 = sphi 0, %s14
    %p11 = scmp.ge.s32.totalorder %s10, 4
    %s17 = sphi 0, %s36
    %s18 = sphi 0, %s32
    %s19 = sphi 0, %s28
    %s20 = sphi 0, %s17
    %s21 = sphi 0, %s18
    %s22 = sphi 0, %s19
    %s23 = sphi 0, %s20
    %s24 = sphi 0, %s21
    %s25 = sphi 0, %s22
    %s41 = sphi 0, %s43
    %s44 = sphi 0, %s41
    %s45 = sphi 0, %s44
    %s61 = sphi 0, %s45
    %s69 = sphi 0, %s71
    %s72 = sphi 0, %s69
    %s73 = sphi 0, %s72
    %s89 = sphi 0, %s73
    %s97 = sphi 0, %s99
    %s100 = sphi 0, %s97
    %s101 = sphi 0, %s100
    %s117 = sphi 0, %s101
    %s121 = sphi 0, %s121
    %s123 = sphi 0, %s121
    %s124 = sphi 0, %s123
    %s138 = sphi 0, %s124
    %s146 = sphi 0, %s148
    %s149 = sphi 0, %s146
    %s150 = sphi 0, %s149
    %s166 = sphi 0, %s150
  $region4: #{tpu_custom_call.1} parent=0 // loop_header_branch
    %13 = sbr.rel (%p11) target = $region8
  $region5: #{tpu_custom_call.1} parent=0 // loop_body
    %s15 = ssub.s32 %s10, 1
    %s16 = ssub.s32 %s10, 2
    %s26 = sadd.s32 1, %s19
    %p27 = scmp.ge.s32.totalorder %s26, 1
    %s28 = scalar_select %p27, 0, %s26
    %s29 = sadd.s32 1, %s18
    %s30 = scalar_select %p27, %s29, %s18
    %p31 = scmp.ge.s32.totalorder %s30, 1
    %s32 = scalar_select %p31, 0, %s30
    %s33 = sadd.s32 1, %s17
    %s34 = scalar_select %p31, %s33, %s17
    %p35 = scmp.ge.s32.totalorder %s34, 2
    %s36 = scalar_select %p35, 0, %s34
    %s37 = ssub.s32 %s17, %s36
    %s38 = ssub.s32 %s18, %s32
    %s39 = sor.u32 %s37, %s38
    %p40 = scmp.eq.s32.totalorder %s39, 0
    %s42 = sadd.s32 %s41, 1
    %s43 = scalar_select %p40, %s41, %s42
    %p46 = pneg %p40
    %p47 = scmp.eq.s32.totalorder %s10, 1
    %p48 = por %p46, %p47
    %p49 = scmp.ne.s32.totalorder %s41, %s44
    %p50 = scmp.eq.s32.totalorder %s10, 0
    %p51 = por %p49, %p50
    %p52 = scmp.ne.s32.totalorder %s41, %s44
    %p53 = scmp.eq.s32.totalorder %s15, 1
    %p54 = por %p52, %p53
    %p55 = scmp.ne.s32.totalorder %s44, %s45
    %p56 = scmp.eq.s32.totalorder %s15, 0
    %p57 = por %p55, %p56
    %p58 = scmp.ne.s32.totalorder %s44, %s45
    %p59 = scmp.eq.s32.totalorder %s16, 1
    %p60 = por %p58, %p59
    %p62 = scmp.ne.s32.totalorder %s45, %s61
    %p63 = scmp.eq.s32.totalorder %s16, 0
    %p64 = por %p62, %p63
    %s65 = ssub.s32 %s17, %s36
    %s66 = ssub.s32 %s19, %s28
    %s67 = sor.u32 %s65, %s66
    %p68 = scmp.eq.s32.totalorder %s67, 0
    %s70 = sadd.s32 %s69, 1
    %s71 = scalar_select %p68, %s69, %s70
    %p74 = pneg %p68
    %p75 = scmp.eq.s32.totalorder %s10, 1
    %p76 = por %p74, %p75
    %p77 = scmp.ne.s32.totalorder %s69, %s72
    %p78 = scmp.eq.s32.totalorder %s10, 0
    %p79 = por %p77, %p78
    %p80 = scmp.ne.s32.totalorder %s69, %s72
    %p81 = scmp.eq.s32.totalorder %s15, 1
    %p82 = por %p80, %p81
    %p83 = scmp.ne.s32.totalorder %s72, %s73
    %p84 = scmp.eq.s32.totalorder %s15, 0
    %p85 = por %p83, %p84
    %p86 = scmp.ne.s32.totalorder %s72, %s73
    %p87 = scmp.eq.s32.totalorder %s16, 1
    %p88 = por %p86, %p87
    %p90 = scmp.ne.s32.totalorder %s73, %s89
    %p91 = scmp.eq.s32.totalorder %s16, 0
    %p92 = por %p90, %p91
    %s93 = ssub.s32 %s17, %s36
    %s94 = ssub.s32 %s19, %s28
    %s95 = sor.u32 %s93, %s94
    %p96 = scmp.eq.s32.totalorder %s95, 0
    %s98 = sadd.s32 %s97, 1
    %s99 = scalar_select %p96, %s97, %s98
    %p102 = pneg %p96
    %p103 = scmp.eq.s32.totalorder %s10, 1
    %p104 = por %p102, %p103
    %p105 = scmp.ne.s32.totalorder %s97, %s100
    %p106 = scmp.eq.s32.totalorder %s10, 0
    %p107 = por %p105, %p106
    %p108 = scmp.ne.s32.totalorder %s97, %s100
    %p109 = scmp.eq.s32.totalorder %s15, 1
    %p110 = por %p108, %p109
    %p111 = scmp.ne.s32.totalorder %s100, %s101
    %p112 = scmp.eq.s32.totalorder %s15, 0
    %p113 = por %p111, %p112
    %p114 = scmp.ne.s32.totalorder %s100, %s101
    %p115 = scmp.eq.s32.totalorder %s16, 1
    %p116 = por %p114, %p115
    %p118 = scmp.ne.s32.totalorder %s101, %s117
    %p119 = scmp.eq.s32.totalorder %s16, 0
    %p120 = por %p118, %p119
    %s122 = sadd.s32 %s121, 1
    %p125 = scmp.eq.s32.totalorder %s10, 1
    %p126 = scmp.ne.s32.totalorder %s121, %s123
    %p127 = scmp.eq.s32.totalorder %s10, 0
    %p128 = por %p126, %p127
    %p129 = scmp.ne.s32.totalorder %s121, %s123
    %p130 = scmp.eq.s32.totalorder %s15, 1
    %p131 = por %p129, %p130
    %p132 = scmp.ne.s32.totalorder %s123, %s124
    %p133 = scmp.eq.s32.totalorder %s15, 0
    %p134 = por %p132, %p133
    %p135 = scmp.ne.s32.totalorder %s123, %s124
    %p136 = scmp.eq.s32.totalorder %s16, 1
    %p137 = por %p135, %p136
    %p139 = scmp.ne.s32.totalorder %s124, %s138
    %p140 = scmp.eq.s32.totalorder %s16, 0
    %p141 = por %p139, %p140
    %s142 = ssub.s32 %s17, %s36
    %s143 = ssub.s32 %s18, %s32
    %s144 = sor.u32 %s142, %s143
    %p145 = scmp.eq.s32.totalorder %s144, 0
    %s147 = sadd.s32 %s146, 1
    %s148 = scalar_select %p145, %s146, %s147
    %p151 = pneg %p145
    %p152 = scmp.eq.s32.totalorder %s10, 1
    %p153 = por %p151, %p152
    %p154 = scmp.ne.s32.totalorder %s146, %s149
    %p155 = scmp.eq.s32.totalorder %s10, 0
    %p156 = por %p154, %p155
    %p157 = scmp.ne.s32.totalorder %s146, %s149
    %p158 = scmp.eq.s32.totalorder %s15, 1
    %p159 = por %p157, %p158
    %p160 = scmp.ne.s32.totalorder %s149, %s150
    %p161 = scmp.eq.s32.totalorder %s15, 0
    %p162 = por %p160, %p161
    %p163 = scmp.ne.s32.totalorder %s149, %s150
    %p164 = scmp.eq.s32.totalorder %s16, 1
    %p165 = por %p163, %p164
    %p167 = scmp.ne.s32.totalorder %s150, %s166
    %p168 = scmp.eq.s32.totalorder %s16, 0
    %p169 = por %p167, %p168
    %p170 = scmp.le.s32.totalorder 1, %s10
    %p171 = scmp.lt.s32.totalorder %s10, 3
    %p172 = pnand %p170, %p171
    %p173 = pneg %p172
    // Predicated region
    $region9: #{tpu_custom_call.1} parent=5 // pred_check
      _
    $region10: #{tpu_custom_call.1} parent=5 // pred_check_branch
      %175 = sbr.rel (%p172) target = $region12
    $region11: #{tpu_custom_call.1} parent=5 // pred_region
      %s176 = ssub.s32 %s10, 1
      // Predicated region
      $region13: #{tpu_custom_call.1} parent=11 // pred_check
        %p177 = pneg %p134
      $region14: #{tpu_custom_call.1} parent=11 // pred_check_branch
        %179 = sbr.rel (%p177) target = $region16
      $region15: #{tpu_custom_call.1} parent=11 // pred_region
        _
      $region16: #{tpu_custom_call.1} parent=11 // pred_fallthru
        _
    $region12: #{tpu_custom_call.1} parent=5 // pred_fallthru
      _
    %p180 = scmp.lt.s32.totalorder %s10, 2
    // Predicated region
    $region17: #{tpu_custom_call.1} parent=5 // pred_check
      %p181 = pneg %p180
    $region18: #{tpu_custom_call.1} parent=5 // pred_check_branch
      %183 = sbr.rel (%p181) target = $region20
    $region19: #{tpu_custom_call.1} parent=5 // pred_region
      // Predicated region
      $region21: #{tpu_custom_call.1} parent=19 // pred_check
        %p184 = pneg %p51
      $region22: #{tpu_custom_call.1} parent=19 // pred_check_branch
        %186 = sbr.rel (%p184) target = $region24
      $region23: #{tpu_custom_call.1} parent=19 // pred_region
        %s187 = smul.u32 8, %s18
        %p188 = scmp.lt.s32.totalorder %s17, 1
        %s189 = scalar_select %p188, %s17, 1
        %p190 = scmp.lt.s32.totalorder %s187, 7
        %s191 = scalar_select %p190, %s187, 7
        %s192 = smul.addr %s189, 8
        %s193 = sadd.s32 %s191, %s192
        %s194 = smul.addr %s193, 8
        %s195 = scalar_lea.vmem %s0, %s194
        %s196 = smul.u32 8, %s18
      $region24: #{tpu_custom_call.1} parent=19 // pred_fallthru
        _
      // Predicated region
      $region25: #{tpu_custom_call.1} parent=19 // pred_check
        %p197 = pneg %p79
      $region26: #{tpu_custom_call.1} parent=19 // pred_check_branch
        %199 = sbr.rel (%p197) target = $region28
      $region27: #{tpu_custom_call.1} parent=19 // pred_region
        %p200 = scmp.lt.s32.totalorder %s17, 1
        %s201 = scalar_select %p200, %s17, 1
        %p202 = scmp.lt.s32.totalorder %s19, 0
        %s203 = scalar_select %p202, %s19, 0
        %s204 = sadd.s32 %s203, %s201
        %s205 = smul.addr %s204, 4
        %s206 = scalar_lea.vmem %s1, %s205
      $region28: #{tpu_custom_call.1} parent=19 // pred_fallthru
        _
      // Predicated region
      $region29: #{tpu_custom_call.1} parent=19 // pred_check
        %p207 = pneg %p107
      $region30: #{tpu_custom_call.1} parent=19 // pred_check_branch
        %209 = sbr.rel (%p207) target = $region32
      $region31: #{tpu_custom_call.1} parent=19 // pred_region
        %p210 = scmp.lt.s32.totalorder %s17, 1
        %s211 = scalar_select %p210, %s17, 1
        %p212 = scmp.lt.s32.totalorder %s19, 0
        %s213 = scalar_select %p212, %s19, 0
        %s214 = sadd.s32 %s213, %s211
        %s215 = smul.addr %s214, 4
        %s216 = scalar_lea.vmem %s2, %s215
      $region32: #{tpu_custom_call.1} parent=19 // pred_fallthru
        _
    $region20: #{tpu_custom_call.1} parent=5 // pred_fallthru
      _
    %p217 = scmp.le.s32.totalorder 1, %s10
    %p218 = scmp.lt.s32.totalorder %s10, 3
    %p219 = pnand %p217, %p218
    %p220 = pneg %p219
    // Predicated region
    $region33: #{tpu_custom_call.1} parent=5 // pred_check
      _
    $region34: #{tpu_custom_call.1} parent=5 // pred_check_branch
      %222 = sbr.rel (%p219) target = $region36
    $region35: #{tpu_custom_call.1} parent=5 // pred_region
      %s223 = ssub.s32 %s10, 1
      %s224 = smul.u32 8, %s21
      %p225 = scmp.lt.s32.totalorder %s20, 1
      %s226 = scalar_select %p225, %s20, 1
      %p227 = scmp.lt.s32.totalorder %s224, 7
      %s228 = scalar_select %p227, %s224, 7
      %s229 = smul.addr %s226, 8
      %s230 = sadd.s32 %s228, %s229
      %s231 = smul.addr %s230, 8
      %s232 = scalar_lea.vmem %s0, %s231
      %p233 = pneg %p57
      %p234 = pneg %p54
      %p235 = scmp.lt.s32.totalorder %s20, 1
      %s236 = scalar_select %p235, %s20, 1
      %p237 = scmp.lt.s32.totalorder %s22, 0
      %s238 = scalar_select %p237, %s22, 0
      %s239 = sadd.s32 %s238, %s236
      %s240 = smul.addr %s239, 4
      %s241 = scalar_lea.vmem %s1, %s240
      %p242 = pneg %p85
      %p243 = pneg %p82
      %p244 = scmp.lt.s32.totalorder %s20, 1
      %s245 = scalar_select %p244, %s20, 1
      %p246 = scmp.lt.s32.totalorder %s22, 0
      %s247 = scalar_select %p246, %s22, 0
      %s248 = sadd.s32 %s247, %s245
      %s249 = smul.addr %s248, 4
      %s250 = scalar_lea.vmem %s2, %s249
      %p251 = pneg %p113
      %p252 = pneg %p110
      %p253 = pneg %p134
      %p254 = pneg %p131
      %p255 = pneg %p162
      %p256 = pneg %p159
      %s257 = smul.u32 8, %s21
      %p258 = scmp.lt.s32.totalorder %s20, 1
      %s259 = scalar_select %p258, %s20, 1
      %p260 = scmp.lt.s32.totalorder %s257, 7
      %s261 = scalar_select %p260, %s257, 7
      %s262 = smul.addr %s259, 8
      %s263 = sadd.s32 %s261, %s262
      %s264 = smul.addr %s263, 8
      %s265 = scalar_lea.vmem %s4, %s264
      %s266 = smul.u32 8, %s21
      %p267 = scmp.lt.s32.totalorder %s20, 1
      %s268 = scalar_select %p267, %s20, 1
      %p269 = scmp.lt.s32.totalorder %s266, 7
      %s270 = scalar_select %p269, %s266, 7
      %s271 = smul.addr %s268, 8
      %s272 = sadd.s32 %s270, %s271
      %s273 = smul.addr %s272, 8
      %s274 = scalar_lea.vmem %s0, %s273
      %s275 = smul.u32 8, %s21
      %p276 = scmp.lt.s32.totalorder %s20, 1
      %s277 = scalar_select %p276, %s20, 1
      %p278 = scmp.lt.s32.totalorder %s22, 0
      %s279 = scalar_select %p278, %s22, 0
      %s280 = sadd.s32 %s279, %s277
      %s281 = smul.addr %s280, 4
      %s282 = scalar_lea.vmem %s1, %s281
      %p283 = scmp.lt.s32.totalorder %s20, 1
      %s284 = scalar_select %p283, %s20, 1
      %p285 = scmp.lt.s32.totalorder %s22, 0
      %s286 = scalar_select %p285, %s22, 0
      %s287 = sadd.s32 %s286, %s284
      %s288 = smul.addr %s287, 4
      %s289 = scalar_lea.vmem %s2, %s288
      %s290 = smul.u32 8, %s21
      %p291 = scmp.lt.s32.totalorder %s20, 1
      %s292 = scalar_select %p291, %s20, 1
      %p293 = scmp.lt.s32.totalorder %s290, 7
      %s294 = scalar_select %p293, %s290, 7
      %s295 = smul.addr %s292, 8
      %s296 = sadd.s32 %s294, %s295
      %s297 = smul.addr %s296, 8
      %s298 = scalar_lea.vmem %s4, %s297
      %s299 = smul.u32 8, %s21
      %v301 = vld [vmem:[%s274] sm:$0xff]
      %v302 = vld [vmem:[%s274 + $0x8] sm:$0xff]
      %v303 = vld [vmem:[%s274 + $0x10] sm:$0xff]
      %v304 = vld [vmem:[%s274 + $0x18] sm:$0xff]
      %v305 = vld [vmem:[%s274 + $0x20] sm:$0xff]
      %v306 = vld [vmem:[%s274 + $0x28] sm:$0xff]
      %v307 = vld [vmem:[%s274 + $0x30] sm:$0xff]
      %v308 = vld [vmem:[%s274 + $0x38] sm:$0xff]
      %v309 = vld [vmem:[%s282] sm:$0x7]
      %v310 = vld [vmem:[%s289] sm:$0x7]
      %312 = vset.pattern.permute.xlu0 0
      %313 = vperm.xlu0 %312, %v301
      %v314 = vpop.permute.xlu0 %313
      %317 = vset.pattern.permute.xlu0 0
      %318 = vperm.xlu0 %317, %v302
      %v319 = vpop.permute.xlu0 %318
      %322 = vset.pattern.permute.xlu0 0
      %323 = vperm.xlu0 %322, %v303
      %v324 = vpop.permute.xlu0 %323
      %327 = vset.pattern.permute.xlu0 0
      %328 = vperm.xlu0 %327, %v304
      %v329 = vpop.permute.xlu0 %328
      %332 = vset.pattern.permute.xlu0 0
      %333 = vperm.xlu0 %332, %v305
      %v334 = vpop.permute.xlu0 %333
      %337 = vset.pattern.permute.xlu0 0
      %338 = vperm.xlu0 %337, %v306
      %v339 = vpop.permute.xlu0 %338
      %342 = vset.pattern.permute.xlu0 0
      %343 = vperm.xlu0 %342, %v307
      %v344 = vpop.permute.xlu0 %343
      %347 = vset.pattern.permute.xlu0 0
      %348 = vperm.xlu0 %347, %v308
      %v349 = vpop.permute.xlu0 %348
      %v351 = vlaneseq
      %v352 = vshrl.u32 %v351, 7
      %v353 = vsub.s32 0, %v352
      %v354 = vrot.slane %v309, %v353
      %v355 = vsub.f32 %v314, %v354
      %v356 = vsub.f32 %v319, %v354
      %v357 = vsub.f32 %v324, %v354
      %v358 = vsub.f32 %v329, %v354
      %v359 = vsub.f32 %v334, %v354
      %v360 = vsub.f32 %v339, %v354
      %v361 = vsub.f32 %v344, %v354
      %v362 = vsub.f32 %v349, %v354
      %363 = vset.pattern.permute.xlu0 1
      %364 = vperm.xlu0 %363, %v301
      %v365 = vpop.permute.xlu0 %364
      %367 = vset.pattern.permute.xlu0 1
      %368 = vperm.xlu0 %367, %v302
      %v369 = vpop.permute.xlu0 %368
      %371 = vset.pattern.permute.xlu0 1
      %372 = vperm.xlu0 %371, %v303
      %v373 = vpop.permute.xlu0 %372
      %375 = vset.pattern.permute.xlu0 1
      %376 = vperm.xlu0 %375, %v304
      %v377 = vpop.permute.xlu0 %376
      %379 = vset.pattern.permute.xlu0 1
      %380 = vperm.xlu0 %379, %v305
      %v381 = vpop.permute.xlu0 %380
      %383 = vset.pattern.permute.xlu0 1
      %384 = vperm.xlu0 %383, %v306
      %v385 = vpop.permute.xlu0 %384
      %387 = vset.pattern.permute.xlu0 1
      %388 = vperm.xlu0 %387, %v307
      %v389 = vpop.permute.xlu0 %388
      %391 = vset.pattern.permute.xlu0 1
      %392 = vperm.xlu0 %391, %v308
      %v393 = vpop.permute.xlu0 %392
      %v395 = vlaneseq
      %v396 = vshrl.u32 %v395, 7
      %v397 = vsub.s32 1, %v396
      %v398 = vrot.slane %v309, %v397
      %v399 = vsub.f32 %v365, %v398
      %v400 = vsub.f32 %v369, %v398
      %v401 = vsub.f32 %v373, %v398
      %v402 = vsub.f32 %v377, %v398
      %v403 = vsub.f32 %v381, %v398
      %v404 = vsub.f32 %v385, %v398
      %v405 = vsub.f32 %v389, %v398
      %v406 = vsub.f32 %v393, %v398
      %407 = vset.pattern.permute.xlu0 2
      %408 = vperm.xlu0 %407, %v301
      %v409 = vpop.permute.xlu0 %408
      %411 = vset.pattern.permute.xlu0 2
      %412 = vperm.xlu0 %411, %v302
      %v413 = vpop.permute.xlu0 %412
      %415 = vset.pattern.permute.xlu0 2
      %416 = vperm.xlu0 %415, %v303
      %v417 = vpop.permute.xlu0 %416
      %419 = vset.pattern.permute.xlu0 2
      %420 = vperm.xlu0 %419, %v304
      %v421 = vpop.permute.xlu0 %420
      %423 = vset.pattern.permute.xlu0 2
      %424 = vperm.xlu0 %423, %v305
      %v425 = vpop.permute.xlu0 %424
      %427 = vset.pattern.permute.xlu0 2
      %428 = vperm.xlu0 %427, %v306
      %v429 = vpop.permute.xlu0 %428
      %431 = vset.pattern.permute.xlu0 2
      %432 = vperm.xlu0 %431, %v307
      %v433 = vpop.permute.xlu0 %432
      %435 = vset.pattern.permute.xlu0 2
      %436 = vperm.xlu0 %435, %v308
      %v437 = vpop.permute.xlu0 %436
      %v439 = vlaneseq
      %v440 = vshrl.u32 %v439, 7
      %v441 = vsub.s32 2, %v440
      %v442 = vrot.slane %v309, %v441
      %v443 = vsub.f32 %v409, %v442
      %v444 = vsub.f32 %v413, %v442
      %v445 = vsub.f32 %v417, %v442
      %v446 = vsub.f32 %v421, %v442
      %v447 = vsub.f32 %v425, %v442
      %v448 = vsub.f32 %v429, %v442
      %v449 = vsub.f32 %v433, %v442
      %v450 = vsub.f32 %v437, %v442
      %v451 = vmul.f32 %v355, %v355
      %v452 = vmul.f32 %v356, %v356
      %v453 = vmul.f32 %v357, %v357
      %v454 = vmul.f32 %v358, %v358
      %v455 = vmul.f32 %v359, %v359
      %v456 = vmul.f32 %v360, %v360
      %v457 = vmul.f32 %v361, %v361
      %v458 = vmul.f32 %v362, %v362
      %v459 = vmul.f32 %v399, %v399
      %v460 = vmul.f32 %v400, %v400
      %v461 = vmul.f32 %v401, %v401
      %v462 = vmul.f32 %v402, %v402
      %v463 = vmul.f32 %v403, %v403
      %v464 = vmul.f32 %v404, %v404
      %v465 = vmul.f32 %v405, %v405
      %v466 = vmul.f32 %v406, %v406
      %v467 = vadd.f32 %v451, %v459
      %v468 = vadd.f32 %v452, %v460
      %v469 = vadd.f32 %v453, %v461
      %v470 = vadd.f32 %v454, %v462
      %v471 = vadd.f32 %v455, %v463
      %v472 = vadd.f32 %v456, %v464
      %v473 = vadd.f32 %v457, %v465
      %v474 = vadd.f32 %v458, %v466
      %v475 = vmul.f32 %v443, %v443
      %v476 = vmul.f32 %v444, %v444
      %v477 = vmul.f32 %v445, %v445
      %v478 = vmul.f32 %v446, %v446
      %v479 = vmul.f32 %v447, %v447
      %v480 = vmul.f32 %v448, %v448
      %v481 = vmul.f32 %v449, %v449
      %v482 = vmul.f32 %v450, %v450
      %v483 = vadd.f32 %v467, %v475
      %v484 = vadd.f32 %v468, %v476
      %v485 = vadd.f32 %v469, %v477
      %v486 = vadd.f32 %v470, %v478
      %v487 = vadd.f32 %v471, %v479
      %v488 = vadd.f32 %v472, %v480
      %v489 = vadd.f32 %v473, %v481
      %v490 = vadd.f32 %v474, %v482
      %v491 = vlaneseq
      %v492 = vshrl.u32 %v491, 7
      %v493 = vsub.s32 0, %v492
      %v494 = vrot.slane %v310, %v493
      %v495 = vmul.f32 %v355, %v494
      %v496 = vmul.f32 %v356, %v494
      %v497 = vmul.f32 %v357, %v494
      %v498 = vmul.f32 %v358, %v494
      %v499 = vmul.f32 %v359, %v494
      %v500 = vmul.f32 %v360, %v494
      %v501 = vmul.f32 %v361, %v494
      %v502 = vmul.f32 %v362, %v494
      %v503 = vlaneseq
      %v504 = vshrl.u32 %v503, 7
      %v505 = vsub.s32 1, %v504
      %v506 = vrot.slane %v310, %v505
      %v507 = vmul.f32 %v399, %v506
      %v508 = vmul.f32 %v400, %v506
      %v509 = vmul.f32 %v401, %v506
      %v510 = vmul.f32 %v402, %v506
      %v511 = vmul.f32 %v403, %v506
      %v512 = vmul.f32 %v404, %v506
      %v513 = vmul.f32 %v405, %v506
      %v514 = vmul.f32 %v406, %v506
      %v515 = vadd.f32 %v495, %v507
      %v516 = vadd.f32 %v496, %v508
      %v517 = vadd.f32 %v497, %v509
      %v518 = vadd.f32 %v498, %v510
      %v519 = vadd.f32 %v499, %v511
      %v520 = vadd.f32 %v500, %v512
      %v521 = vadd.f32 %v501, %v513
      %v522 = vadd.f32 %v502, %v514
      %v523 = vlaneseq
      %v524 = vshrl.u32 %v523, 7
      %v525 = vsub.s32 2, %v524
      %v526 = vrot.slane %v310, %v525
      %v527 = vmul.f32 %v443, %v526
      %v528 = vmul.f32 %v444, %v526
      %v529 = vmul.f32 %v445, %v526
      %v530 = vmul.f32 %v446, %v526
      %v531 = vmul.f32 %v447, %v526
      %v532 = vmul.f32 %v448, %v526
      %v533 = vmul.f32 %v449, %v526
      %v534 = vmul.f32 %v450, %v526
      %v535 = vadd.f32 %v515, %v527
      %v536 = vadd.f32 %v516, %v528
      %v537 = vadd.f32 %v517, %v529
      %v538 = vadd.f32 %v518, %v530
      %v539 = vadd.f32 %v519, %v531
      %v540 = vadd.f32 %v520, %v532
      %v541 = vadd.f32 %v521, %v533
      %v542 = vadd.f32 %v522, %v534
      %vm543 = vcmp.lt.f32.partialorder %v483, 0.0001
      %vm544 = vcmp.lt.f32.partialorder %v484, 0.0001
      %vm545 = vcmp.lt.f32.partialorder %v485, 0.0001
      %vm546 = vcmp.lt.f32.partialorder %v486, 0.0001
      %vm547 = vcmp.lt.f32.partialorder %v487, 0.0001
      %vm548 = vcmp.lt.f32.partialorder %v488, 0.0001
      %vm549 = vcmp.lt.f32.partialorder %v489, 0.0001
      %vm550 = vcmp.lt.f32.partialorder %v490, 0.0001
      %v551 = vsub.f32 %v535, 0.001
      %v552 = vsub.f32 %v536, 0.001
      %v553 = vsub.f32 %v537, 0.001
      %v554 = vsub.f32 %v538, 0.001
      %v555 = vsub.f32 %v539, 0.001
      %v556 = vsub.f32 %v540, 0.001
      %v557 = vsub.f32 %v541, 0.001
      %v558 = vsub.f32 %v542, 0.001
      %vm559 = vcmp.ge.f32.partialorder %v535, -0.01
      %vm560 = vcmp.ge.f32.partialorder %v536, -0.01
      %vm561 = vcmp.ge.f32.partialorder %v537, -0.01
      %vm562 = vcmp.ge.f32.partialorder %v538, -0.01
      %vm563 = vcmp.ge.f32.partialorder %v539, -0.01
      %vm564 = vcmp.ge.f32.partialorder %v540, -0.01
      %vm565 = vcmp.ge.f32.partialorder %v541, -0.01
      %vm566 = vcmp.ge.f32.partialorder %v542, -0.01
      %vm567 = vcmp.lt.f32.partialorder %v551, 0.0
      %vm568 = vcmp.lt.f32.partialorder %v552, 0.0
      %vm569 = vcmp.lt.f32.partialorder %v553, 0.0
      %vm570 = vcmp.lt.f32.partialorder %v554, 0.0
      %vm571 = vcmp.lt.f32.partialorder %v555, 0.0
      %vm572 = vcmp.lt.f32.partialorder %v556, 0.0
      %vm573 = vcmp.lt.f32.partialorder %v557, 0.0
      %vm574 = vcmp.lt.f32.partialorder %v558, 0.0
      %vm575 = vmand %vm559, %vm567
      %vm576 = vmand %vm560, %vm568
      %vm577 = vmand %vm561, %vm569
      %vm578 = vmand %vm562, %vm570
      %vm579 = vmand %vm563, %vm571
      %vm580 = vmand %vm564, %vm572
      %vm581 = vmand %vm565, %vm573
      %vm582 = vmand %vm566, %vm574
      %v583 = vsel %vm575, %v551, 0.0
      %v584 = vsel %vm576, %v552, 0.0
      %v585 = vsel %vm577, %v553, 0.0
      %v586 = vsel %vm578, %v554, 0.0
      %v587 = vsel %vm579, %v555, 0.0
      %v588 = vsel %vm580, %v556, 0.0
      %v589 = vsel %vm581, %v557, 0.0
      %v590 = vsel %vm582, %v558, 0.0
      %v591 = vsel %vm575, 1, 0
      %v592 = vsel %vm576, 1, 0
      %v593 = vsel %vm577, 1, 0
      %v594 = vsel %vm578, 1, 0
      %v595 = vsel %vm579, 1, 0
      %v596 = vsel %vm580, 1, 0
      %v597 = vsel %vm581, 1, 0
      %v598 = vsel %vm582, 1, 0
      %v599 = vcvt.s32.f32 %v591
      %v600 = vcvt.s32.f32 %v592
      %v601 = vcvt.s32.f32 %v593
      %v602 = vcvt.s32.f32 %v594
      %v603 = vcvt.s32.f32 %v595
      %v604 = vcvt.s32.f32 %v596
      %v605 = vcvt.s32.f32 %v597
      %v606 = vcvt.s32.f32 %v598
      %v607 = vsel %vm543, 1, 0
      %v608 = vsel %vm544, 1, 0
      %v609 = vsel %vm545, 1, 0
      %v610 = vsel %vm546, 1, 0
      %v611 = vsel %vm547, 1, 0
      %v612 = vsel %vm548, 1, 0
      %v613 = vsel %vm549, 1, 0
      %v614 = vsel %vm550, 1, 0
      %v615 = vcvt.s32.f32 %v607
      %v616 = vcvt.s32.f32 %v608
      %v617 = vcvt.s32.f32 %v609
      %v618 = vcvt.s32.f32 %v610
      %v619 = vcvt.s32.f32 %v611
      %v620 = vcvt.s32.f32 %v612
      %v621 = vcvt.s32.f32 %v613
      %v622 = vcvt.s32.f32 %v614
      %v623 = vpack.c.bf16 %v616, %v615
      %v624 = vpack.c.bf16 %v618, %v617
      %v625 = vpack.c.bf16 %v620, %v619
      %v626 = vpack.c.bf16 %v622, %v621
      %p627 = scmp.eq.s32.totalorder %s22, 0
      // Predicated region
      $region37: #{tpu_custom_call.1} parent=35 // pred_check
        %p628 = pneg %p627
      $region38: #{tpu_custom_call.1} parent=35 // pred_check_branch
        %630 = sbr.rel (%p628) target = $region40
      $region39: #{tpu_custom_call.1} parent=35 // pred_region
        %vm631 = vcmask 7168
        %632 = vst.msk [vmem:[#allocation2] sm:$0xff] %vm631, 0.0
        %633 = vst.msk [vmem:[#allocation2 + $0x8] sm:$0xff] %vm631, 0.0
        %634 = vst.msk [vmem:[#allocation2 + $0x10] sm:$0xff] %vm631, 0.0
        %635 = vst.msk [vmem:[#allocation2 + $0x18] sm:$0xff] %vm631, 0.0
        %636 = vst.msk [vmem:[#allocation2 + $0x20] sm:$0xff] %vm631, 0.0
        %637 = vst.msk [vmem:[#allocation2 + $0x28] sm:$0xff] %vm631, 0.0
        %638 = vst.msk [vmem:[#allocation2 + $0x30] sm:$0xff] %vm631, 0.0
        %639 = vst.msk [vmem:[#allocation2 + $0x38] sm:$0xff] %vm631, 0.0
        %640 = vst.msk [vmem:[#allocation3] sm:$0xff] %vm631, 0.0
        %641 = vst.msk [vmem:[#allocation3 + $0x8] sm:$0xff] %vm631, 0.0
        %642 = vst.msk [vmem:[#allocation3 + $0x10] sm:$0xff] %vm631, 0.0
        %643 = vst.msk [vmem:[#allocation3 + $0x18] sm:$0xff] %vm631, 0.0
        %644 = vst.msk [vmem:[#allocation3 + $0x20] sm:$0xff] %vm631, 0.0
        %645 = vst.msk [vmem:[#allocation3 + $0x28] sm:$0xff] %vm631, 0.0
        %646 = vst.msk [vmem:[#allocation3 + $0x30] sm:$0xff] %vm631, 0.0
        %647 = vst.msk [vmem:[#allocation3 + $0x38] sm:$0xff] %vm631, 0.0
        %648 = vst.msk [vmem:[#allocation4] sm:$0xff] %vm631, 0.0
        %649 = vst.msk [vmem:[#allocation4 + $0x8] sm:$0xff] %vm631, 0.0
        %650 = vst.msk [vmem:[#allocation4 + $0x10] sm:$0xff] %vm631, 0.0
        %651 = vst.msk [vmem:[#allocation4 + $0x18] sm:$0xff] %vm631, 0.0
        %652 = vst.msk [vmem:[#allocation4 + $0x20] sm:$0xff] %vm631, 0.0
        %653 = vst.msk [vmem:[#allocation4 + $0x28] sm:$0xff] %vm631, 0.0
        %654 = vst.msk [vmem:[#allocation4 + $0x30] sm:$0xff] %vm631, 0.0
        %655 = vst.msk [vmem:[#allocation4 + $0x38] sm:$0xff] %vm631, 0.0
        %656 = vst.msk [vmem:[#allocation5] sm:$0xff] %vm631, 0.0
        %657 = vst.msk [vmem:[#allocation5 + $0x8] sm:$0xff] %vm631, 0.0
        %658 = vst.msk [vmem:[#allocation5 + $0x10] sm:$0xff] %vm631, 0.0
        %659 = vst.msk [vmem:[#allocation5 + $0x18] sm:$0xff] %vm631, 0.0
        %660 = vst.msk [vmem:[#allocation5 + $0x20] sm:$0xff] %vm631, 0.0
        %661 = vst.msk [vmem:[#allocation5 + $0x28] sm:$0xff] %vm631, 0.0
        %662 = vst.msk [vmem:[#allocation5 + $0x30] sm:$0xff] %vm631, 0.0
        %663 = vst.msk [vmem:[#allocation5 + $0x38] sm:$0xff] %vm631, 0.0
        %664 = vst.msk [vmem:[#allocation6] sm:$0xff] %vm631, 0.0
        %665 = vst.msk [vmem:[#allocation6 + $0x8] sm:$0xff] %vm631, 0.0
        %666 = vst.msk [vmem:[#allocation6 + $0x10] sm:$0xff] %vm631, 0.0
        %667 = vst.msk [vmem:[#allocation6 + $0x18] sm:$0xff] %vm631, 0.0
        %668 = vst.msk [vmem:[#allocation6 + $0x20] sm:$0xff] %vm631, 0.0
        %669 = vst.msk [vmem:[#allocation6 + $0x28] sm:$0xff] %vm631, 0.0
        %670 = vst.msk [vmem:[#allocation6 + $0x30] sm:$0xff] %vm631, 0.0
        %671 = vst.msk [vmem:[#allocation6 + $0x38] sm:$0xff] %vm631, 0.0
        %672 = vst.msk [vmem:[#allocation7] sm:$0xff] %vm631, %v583
        %673 = vst.msk [vmem:[#allocation7 + $0x8] sm:$0xff] %vm631, %v584
        %674 = vst.msk [vmem:[#allocation7 + $0x10] sm:$0xff] %vm631, %v585
        %675 = vst.msk [vmem:[#allocation7 + $0x18] sm:$0xff] %vm631, %v586
        %676 = vst.msk [vmem:[#allocation7 + $0x20] sm:$0xff] %vm631, %v587
        %677 = vst.msk [vmem:[#allocation7 + $0x28] sm:$0xff] %vm631, %v588
        %678 = vst.msk [vmem:[#allocation7 + $0x30] sm:$0xff] %vm631, %v589
        %679 = vst.msk [vmem:[#allocation7 + $0x38] sm:$0xff] %vm631, %v590
        %680 = vst.msk [vmem:[#allocation8] sm:$0xff] %vm631, %v599
        %681 = vst.msk [vmem:[#allocation8 + $0x8] sm:$0xff] %vm631, %v600
        %682 = vst.msk [vmem:[#allocation8 + $0x10] sm:$0xff] %vm631, %v601
        %683 = vst.msk [vmem:[#allocation8 + $0x18] sm:$0xff] %vm631, %v602
        %684 = vst.msk [vmem:[#allocation8 + $0x20] sm:$0xff] %vm631, %v603
        %685 = vst.msk [vmem:[#allocation8 + $0x28] sm:$0xff] %vm631, %v604
        %686 = vst.msk [vmem:[#allocation8 + $0x30] sm:$0xff] %vm631, %v605
        %687 = vst.msk [vmem:[#allocation8 + $0x38] sm:$0xff] %vm631, %v606
      $region40: #{tpu_custom_call.1} parent=35 // pred_fallthru
        _
      %v688 = vld [vmem:[%s3] sm:$0xf]
      %v689 = vld [vmem:[%s3 + $0x4] sm:$0xf]
      %v690 = vld [vmem:[%s3 + $0x8] sm:$0xf]
      %v691 = vld [vmem:[%s3 + $0xc] sm:$0xf]
      %v692 = vld [vmem:[%s3 + $0x10] sm:$0xf]
      %v693 = vld [vmem:[%s3 + $0x14] sm:$0xf]
      %v694 = vld [vmem:[%s3 + $0x18] sm:$0xf]
      %v695 = vld [vmem:[%s3 + $0x1c] sm:$0xf]
      %v696 = vld [vmem:[%s3 + $0x20] sm:$0xf]
      %v697 = vld [vmem:[%s3 + $0x24] sm:$0xf]
      %v698 = vld [vmem:[%s3 + $0x28] sm:$0xf]
      %v699 = vld [vmem:[%s3 + $0x2c] sm:$0xf]
      %v700 = vld [vmem:[%s3 + $0x30] sm:$0xf]
      %v701 = vld [vmem:[%s3 + $0x34] sm:$0xf]
      %v702 = vld [vmem:[%s3 + $0x38] sm:$0xf]
      %v703 = vld [vmem:[%s3 + $0x3c] sm:$0xf]
      %v704 = vld [vmem:[#allocation2] sm:$0xff]
      %v705 = vld [vmem:[#allocation2 + $0x8] sm:$0xff]
      %v706 = vld [vmem:[#allocation2 + $0x10] sm:$0xff]
      %v707 = vld [vmem:[#allocation2 + $0x18] sm:$0xff]
      %v708 = vld [vmem:[#allocation2 + $0x20] sm:$0xff]
      %v709 = vld [vmem:[#allocation2 + $0x28] sm:$0xff]
      %v710 = vld [vmem:[#allocation2 + $0x30] sm:$0xff]
      %v711 = vld [vmem:[#allocation2 + $0x38] sm:$0xff]
      %v728 = vunpack.c.l.b16 %v688
      %v729 = vunpack.c.l.b16 %v689
      %v730 = vunpack.c.l.b16 %v690
      %v731 = vunpack.c.l.b16 %v691
      %v732 = vunpack.c.l.b16 %v692
      %v733 = vunpack.c.l.b16 %v693
      %v734 = vunpack.c.l.b16 %v694
      %v735 = vunpack.c.l.b16 %v695
      %v736 = vunpack.c.l.b16 %v696
      %v737 = vunpack.c.l.b16 %v697
      %v738 = vunpack.c.l.b16 %v698
      %v739 = vunpack.c.l.b16 %v699
      %v740 = vunpack.c.l.b16 %v700
      %v741 = vunpack.c.l.b16 %v701
      %v742 = vunpack.c.l.b16 %v702
      %v743 = vunpack.c.l.b16 %v703
      %v744 = vpack.c.b16 %v729, %v728
      %v745 = vpack.c.b16 %v731, %v730
      %v746 = vpack.c.b16 %v733, %v732
      %v747 = vpack.c.b16 %v735, %v734
      %v748 = vpack.c.b16 %v737, %v736
      %v749 = vpack.c.b16 %v739, %v738
      %v750 = vpack.c.b16 %v741, %v740
      %v751 = vpack.c.b16 %v743, %v742
      %760 = vmatprep.subr.bf16.mxu0 0
      %761 = vmatpush1.bf16.msra.mxu0 %v744
      %762 = vmatprep.subr.bf16.mxu0 0
      %763 = vmatpush1.bf16.msra.mxu0 %v745
      %764 = vmatprep.subr.bf16.mxu0 0
      %765 = vmatpush1.bf16.msra.mxu0 %v746
      %766 = vmatprep.subr.bf16.mxu0 0
      %767 = vmatpush1.bf16.msra.mxu0 %v747
      %768 = vmatprep.subr.bf16.mxu0 0
      %769 = vmatpush1.bf16.msra.mxu0 %v748
      %770 = vmatprep.subr.bf16.mxu0 0
      %771 = vmatpush1.bf16.msra.mxu0 %v749
      %772 = vmatprep.subr.bf16.mxu0 0
      %773 = vmatpush1.bf16.msra.mxu0 %v750
      %774 = vmatprep.subr.bf16.mxu0 0
      %775 = vmatpush1.bf16.msra.mxu0 %v751
      %776 = vmatprep.subr.bf16.mxu0 0
      %777 = vmatpush1.bf16.msra.mxu0 0
      %778 = vmatprep.subr.bf16.mxu0 0
      %779 = vmatpush1.bf16.msra.mxu0 0
      %780 = vmatprep.subr.bf16.mxu0 0
      %781 = vmatpush1.bf16.msra.mxu0 0
      %782 = vmatprep.subr.bf16.mxu0 0
      %783 = vmatpush1.bf16.msra.mxu0 0
      %784 = vmatprep.subr.bf16.mxu0 0
      %785 = vmatpush1.bf16.msra.mxu0 0
      %786 = vmatprep.subr.bf16.mxu0 0
      %787 = vmatpush1.bf16.msra.mxu0 0
      %788 = vmatprep.subr.bf16.mxu0 0
      %789 = vmatpush1.bf16.msra.mxu0 0
      %790 = vmatprep.subr.bf16.mxu0 0
      %791 = vmatpush1.bf16.msra.mxu0 0
      %792 = vmatprep.mubr.bf16.mxu0 0
      %793 = vmatmul.mubr.bf16.gmra.mrb[0].mxu0 %v623
      %v794 = vpop.f32.mrb[0].mxu0
      %v795 = vadd.f32 0.0, %v794
      %v796 = vpop.f32.mrb[0].mxu0
      %v797 = vpop.f32.mrb[0].mxu0
      %v798 = vadd.f32 0.0, %v797
      %v799 = vpop.f32.mrb[0].mxu0
      %800 = vmatprep.mubr.bf16.mxu0 0
      %801 = vmatmul.mubr.bf16.gmra.mrb[0].mxu0 %v624
      %v802 = vpop.f32.mrb[0].mxu0
      %v803 = vadd.f32 0.0, %v802
      %v804 = vpop.f32.mrb[0].mxu0
      %v805 = vpop.f32.mrb[0].mxu0
      %v806 = vadd.f32 0.0, %v805
      %v807 = vpop.f32.mrb[0].mxu0
      %808 = vmatprep.mubr.bf16.mxu0 0
      %809 = vmatmul.mubr.bf16.gmra.mrb[0].mxu0 %v625
      %v810 = vpop.f32.mrb[0].mxu0
      %v811 = vadd.f32 0.0, %v810
      %v812 = vpop.f32.mrb[0].mxu0
      %v813 = vpop.f32.mrb[0].mxu0
      %v814 = vadd.f32 0.0, %v813
      %v815 = vpop.f32.mrb[0].mxu0
      %816 = vmatprep.mubr.bf16.mxu0 0
      %817 = vmatmul.mubr.bf16.gmra.mrb[0].mxu0 %v626
      %v818 = vpop.f32.mrb[0].mxu0
      %v819 = vadd.f32 0.0, %v818
      %v820 = vpop.f32.mrb[0].mxu0
      %v821 = vpop.f32.mrb[0].mxu0
      %v822 = vadd.f32 0.0, %v821
      %v823 = vpop.f32.mrb[0].mxu0
      %824 = vdwg.mxu0
      %826 = vset.pattern.permute.xlu0 0
      %827 = vperm.xlu0 %826, %v704
      %v828 = vpop.permute.xlu0 %827
      %831 = vset.pattern.permute.xlu0 0
      %832 = vperm.xlu0 %831, %v705
      %v833 = vpop.permute.xlu0 %832
      %836 = vset.pattern.permute.xlu0 0
      %837 = vperm.xlu0 %836, %v706
      %v838 = vpop.permute.xlu0 %837
      %841 = vset.pattern.permute.xlu0 0
      %842 = vperm.xlu0 %841, %v707
      %v843 = vpop.permute.xlu0 %842
      %846 = vset.pattern.permute.xlu0 0
      %847 = vperm.xlu0 %846, %v708
      %v848 = vpop.permute.xlu0 %847
      %851 = vset.pattern.permute.xlu0 0
      %852 = vperm.xlu0 %851, %v709
      %v853 = vpop.permute.xlu0 %852
      %856 = vset.pattern.permute.xlu0 0
      %857 = vperm.xlu0 %856, %v710
      %v858 = vpop.permute.xlu0 %857
      %861 = vset.pattern.permute.xlu0 0
      %862 = vperm.xlu0 %861, %v711
      %v863 = vpop.permute.xlu0 %862
      %v865 = vadd.f32 %v828, %v795
      %v866 = vadd.f32 %v833, %v798
      %v867 = vadd.f32 %v838, %v803
      %v868 = vadd.f32 %v843, %v806
      %v869 = vadd.f32 %v848, %v811
      %v870 = vadd.f32 %v853, %v814
      %v871 = vadd.f32 %v858, %v819
      %v872 = vadd.f32 %v863, %v822
      %vm873 = vcmp.le.f32.partialorder %v865, 4.0
      %vm874 = vcmp.le.f32.partialorder %v866, 4.0
      %vm875 = vcmp.le.f32.partialorder %v867, 4.0
      %vm876 = vcmp.le.f32.partialorder %v868, 4.0
      %vm877 = vcmp.le.f32.partialorder %v869, 4.0
      %vm878 = vcmp.le.f32.partialorder %v870, 4.0
      %vm879 = vcmp.le.f32.partialorder %v871, 4.0
      %vm880 = vcmp.le.f32.partialorder %v872, 4.0
      %vm881 = vmand %vm543, %vm873
      %vm882 = vmand %vm544, %vm874
      %vm883 = vmand %vm545, %vm875
      %vm884 = vmand %vm546, %vm876
      %vm885 = vmand %vm547, %vm877
      %vm886 = vmand %vm548, %vm878
      %vm887 = vmand %vm549, %vm879
      %vm888 = vmand %vm550, %vm880
      %vm889 = vcmp.eq.f32.partialorder %v865, 1.0
      %vm890 = vcmp.eq.f32.partialorder %v866, 1.0
      %vm891 = vcmp.eq.f32.partialorder %v867, 1.0
      %vm892 = vcmp.eq.f32.partialorder %v868, 1.0
      %vm893 = vcmp.eq.f32.partialorder %v869, 1.0
      %vm894 = vcmp.eq.f32.partialorder %v870, 1.0
      %vm895 = vcmp.eq.f32.partialorder %v871, 1.0
      %vm896 = vcmp.eq.f32.partialorder %v872, 1.0
      %vm897 = vmand %vm543, %vm889
      %vm898 = vmand %vm544, %vm890
      %vm899 = vmand %vm545, %vm891
      %vm900 = vmand %vm546, %vm892
      %vm901 = vmand %vm547, %vm893
      %vm902 = vmand %vm548, %vm894
      %vm903 = vmand %vm549, %vm895
      %vm904 = vmand %vm550, %vm896
      %v905 = vld [vmem:[#allocation3] sm:$0xff]
      %v906 = vld [vmem:[#allocation3 + $0x8] sm:$0xff]
      %v907 = vld [vmem:[#allocation3 + $0x10] sm:$0xff]
      %v908 = vld [vmem:[#allocation3 + $0x18] sm:$0xff]
      %v909 = vld [vmem:[#allocation3 + $0x20] sm:$0xff]
      %v910 = vld [vmem:[#allocation3 + $0x28] sm:$0xff]
      %v911 = vld [vmem:[#allocation3 + $0x30] sm:$0xff]
      %v912 = vld [vmem:[#allocation3 + $0x38] sm:$0xff]
      %v913 = vsel %vm881, %v583, 0.0
      %v914 = vsel %vm882, %v584, 0.0
      %v915 = vsel %vm883, %v585, 0.0
      %v916 = vsel %vm884, %v586, 0.0
      %v917 = vsel %vm885, %v587, 0.0
      %v918 = vsel %vm886, %v588, 0.0
      %v919 = vsel %vm887, %v589, 0.0
      %v920 = vsel %vm888, %v590, 0.0
      %921 = vadd.xlane.f32.xlu0 %v913
      %v922 = vpop.xlane.xlu0 %921
      %923 = vadd.xlane.f32.xlu0 %v914
      %v924 = vpop.xlane.xlu0 %923
      %925 = vadd.xlane.f32.xlu0 %v915
      %v926 = vpop.xlane.xlu0 %925
      %927 = vadd.xlane.f32.xlu0 %v916
      %v928 = vpop.xlane.xlu0 %927
      %929 = vadd.xlane.f32.xlu0 %v917
      %v930 = vpop.xlane.xlu0 %929
      %931 = vadd.xlane.f32.xlu0 %v918
      %v932 = vpop.xlane.xlu0 %931
      %933 = vadd.xlane.f32.xlu0 %v919
      %v934 = vpop.xlane.xlu0 %933
      %935 = vadd.xlane.f32.xlu0 %v920
      %v936 = vpop.xlane.xlu0 %935
      %v937 = vadd.f32 %v905, %v922
      %v938 = vadd.f32 %v906, %v924
      %v939 = vadd.f32 %v907, %v926
      %v940 = vadd.f32 %v908, %v928
      %v941 = vadd.f32 %v909, %v930
      %v942 = vadd.f32 %v910, %v932
      %v943 = vadd.f32 %v911, %v934
      %v944 = vadd.f32 %v912, %v936
      %vm945 = vcmask 7168
      %946 = vst.msk [vmem:[#allocation3] sm:$0xff] %vm945, %v937
      %947 = vst.msk [vmem:[#allocation3 + $0x8] sm:$0xff] %vm945, %v938
      %948 = vst.msk [vmem:[#allocation3 + $0x10] sm:$0xff] %vm945, %v939
      %949 = vst.msk [vmem:[#allocation3 + $0x18] sm:$0xff] %vm945, %v940
      %950 = vst.msk [vmem:[#allocation3 + $0x20] sm:$0xff] %vm945, %v941
      %951 = vst.msk [vmem:[#allocation3 + $0x28] sm:$0xff] %vm945, %v942
      %952 = vst.msk [vmem:[#allocation3 + $0x30] sm:$0xff] %vm945, %v943
      %953 = vst.msk [vmem:[#allocation3 + $0x38] sm:$0xff] %vm945, %v944
      %v954 = vld [vmem:[#allocation4] sm:$0xff]
      %v955 = vld [vmem:[#allocation4 + $0x8] sm:$0xff]
      %v956 = vld [vmem:[#allocation4 + $0x10] sm:$0xff]
      %v957 = vld [vmem:[#allocation4 + $0x18] sm:$0xff]
      %v958 = vld [vmem:[#allocation4 + $0x20] sm:$0xff]
      %v959 = vld [vmem:[#allocation4 + $0x28] sm:$0xff]
      %v960 = vld [vmem:[#allocation4 + $0x30] sm:$0xff]
      %v961 = vld [vmem:[#allocation4 + $0x38] sm:$0xff]
      %v962 = vsel %vm881, %v599, 0.0
      %v963 = vsel %vm882, %v600, 0.0
      %v964 = vsel %vm883, %v601, 0.0
      %v965 = vsel %vm884, %v602, 0.0
      %v966 = vsel %vm885, %v603, 0.0
      %v967 = vsel %vm886, %v604, 0.0
      %v968 = vsel %vm887, %v605, 0.0
      %v969 = vsel %vm888, %v606, 0.0
      %970 = vadd.xlane.f32.xlu0 %v962
      %v971 = vpop.xlane.xlu0 %970
      %972 = vadd.xlane.f32.xlu0 %v963
      %v973 = vpop.xlane.xlu0 %972
      %974 = vadd.xlane.f32.xlu0 %v964
      %v975 = vpop.xlane.xlu0 %974
      %976 = vadd.xlane.f32.xlu0 %v965
      %v977 = vpop.xlane.xlu0 %976
      %978 = vadd.xlane.f32.xlu0 %v966
      %v979 = vpop.xlane.xlu0 %978
      %980 = vadd.xlane.f32.xlu0 %v967
      %v981 = vpop.xlane.xlu0 %980
      %982 = vadd.xlane.f32.xlu0 %v968
      %v983 = vpop.xlane.xlu0 %982
      %984 = vadd.xlane.f32.xlu0 %v969
      %v985 = vpop.xlane.xlu0 %984
      %v986 = vadd.f32 %v954, %v971
      %v987 = vadd.f32 %v955, %v973
      %v988 = vadd.f32 %v956, %v975
      %v989 = vadd.f32 %v957, %v977
      %v990 = vadd.f32 %v958, %v979
      %v991 = vadd.f32 %v959, %v981
      %v992 = vadd.f32 %v960, %v983
      %v993 = vadd.f32 %v961, %v985
      %994 = vst.msk [vmem:[#allocation4] sm:$0xff] %vm945, %v986
      %995 = vst.msk [vmem:[#allocation4 + $0x8] sm:$0xff] %vm945, %v987
      %996 = vst.msk [vmem:[#allocation4 + $0x10] sm:$0xff] %vm945, %v988
      %997 = vst.msk [vmem:[#allocation4 + $0x18] sm:$0xff] %vm945, %v989
      %998 = vst.msk [vmem:[#allocation4 + $0x20] sm:$0xff] %vm945, %v990
      %999 = vst.msk [vmem:[#allocation4 + $0x28] sm:$0xff] %vm945, %v991
      %1000 = vst.msk [vmem:[#allocation4 + $0x30] sm:$0xff] %vm945, %v992
      %1001 = vst.msk [vmem:[#allocation4 + $0x38] sm:$0xff] %vm945, %v993
      %v1002 = vld [vmem:[#allocation5] sm:$0xff]
      %v1003 = vld [vmem:[#allocation5 + $0x8] sm:$0xff]
      %v1004 = vld [vmem:[#allocation5 + $0x10] sm:$0xff]
      %v1005 = vld [vmem:[#allocation5 + $0x18] sm:$0xff]
      %v1006 = vld [vmem:[#allocation5 + $0x20] sm:$0xff]
      %v1007 = vld [vmem:[#allocation5 + $0x28] sm:$0xff]
      %v1008 = vld [vmem:[#allocation5 + $0x30] sm:$0xff]
      %v1009 = vld [vmem:[#allocation5 + $0x38] sm:$0xff]
      %v1010 = vsel %vm897, %v583, 0.0
      %v1011 = vsel %vm898, %v584, 0.0
      %v1012 = vsel %vm899, %v585, 0.0
      %v1013 = vsel %vm900, %v586, 0.0
      %v1014 = vsel %vm901, %v587, 0.0
      %v1015 = vsel %vm902, %v588, 0.0
      %v1016 = vsel %vm903, %v589, 0.0
      %v1017 = vsel %vm904, %v590, 0.0
      %1018 = vadd.xlane.f32.xlu0 %v1010
      %v1019 = vpop.xlane.xlu0 %1018
      %1020 = vadd.xlane.f32.xlu0 %v1011
      %v1021 = vpop.xlane.xlu0 %1020
      %1022 = vadd.xlane.f32.xlu0 %v1012
      %v1023 = vpop.xlane.xlu0 %1022
      %1024 = vadd.xlane.f32.xlu0 %v1013
      %v1025 = vpop.xlane.xlu0 %1024
      %1026 = vadd.xlane.f32.xlu0 %v1014
      %v1027 = vpop.xlane.xlu0 %1026
      %1028 = vadd.xlane.f32.xlu0 %v1015
      %v1029 = vpop.xlane.xlu0 %1028
      %1030 = vadd.xlane.f32.xlu0 %v1016
      %v1031 = vpop.xlane.xlu0 %1030
      %1032 = vadd.xlane.f32.xlu0 %v1017
      %v1033 = vpop.xlane.xlu0 %1032
      %v1034 = vadd.f32 %v1002, %v1019
      %v1035 = vadd.f32 %v1003, %v1021
      %v1036 = vadd.f32 %v1004, %v1023
      %v1037 = vadd.f32 %v1005, %v1025
      %v1038 = vadd.f32 %v1006, %v1027
      %v1039 = vadd.f32 %v1007, %v1029
      %v1040 = vadd.f32 %v1008, %v1031
      %v1041 = vadd.f32 %v1009, %v1033
      %1042 = vst.msk [vmem:[#allocation5] sm:$0xff] %vm945, %v1034
      %1043 = vst.msk [vmem:[#allocation5 + $0x8] sm:$0xff] %vm945, %v1035
      %1044 = vst.msk [vmem:[#allocation5 + $0x10] sm:$0xff] %vm945, %v1036
      %1045 = vst.msk [vmem:[#allocation5 + $0x18] sm:$0xff] %vm945, %v1037
      %1046 = vst.msk [vmem:[#allocation5 + $0x20] sm:$0xff] %vm945, %v1038
      %1047 = vst.msk [vmem:[#allocation5 + $0x28] sm:$0xff] %vm945, %v1039
      %1048 = vst.msk [vmem:[#allocation5 + $0x30] sm:$0xff] %vm945, %v1040
      %1049 = vst.msk [vmem:[#allocation5 + $0x38] sm:$0xff] %vm945, %v1041
      %v1050 = vld [vmem:[#allocation6] sm:$0xff]
      %v1051 = vld [vmem:[#allocation6 + $0x8] sm:$0xff]
      %v1052 = vld [vmem:[#allocation6 + $0x10] sm:$0xff]
      %v1053 = vld [vmem:[#allocation6 + $0x18] sm:$0xff]
      %v1054 = vld [vmem:[#allocation6 + $0x20] sm:$0xff]
      %v1055 = vld [vmem:[#allocation6 + $0x28] sm:$0xff]
      %v1056 = vld [vmem:[#allocation6 + $0x30] sm:$0xff]
      %v1057 = vld [vmem:[#allocation6 + $0x38] sm:$0xff]
      %v1058 = vsel %vm897, %v599, 0.0
      %v1059 = vsel %vm898, %v600, 0.0
      %v1060 = vsel %vm899, %v601, 0.0
      %v1061 = vsel %vm900, %v602, 0.0
      %v1062 = vsel %vm901, %v603, 0.0
      %v1063 = vsel %vm902, %v604, 0.0
      %v1064 = vsel %vm903, %v605, 0.0
      %v1065 = vsel %vm904, %v606, 0.0
      %1066 = vadd.xlane.f32.xlu0 %v1058
      %v1067 = vpop.xlane.xlu0 %1066
      %1068 = vadd.xlane.f32.xlu0 %v1059
      %v1069 = vpop.xlane.xlu0 %1068
      %1070 = vadd.xlane.f32.xlu0 %v1060
      %v1071 = vpop.xlane.xlu0 %1070
      %1072 = vadd.xlane.f32.xlu0 %v1061
      %v1073 = vpop.xlane.xlu0 %1072
      %1074 = vadd.xlane.f32.xlu0 %v1062
      %v1075 = vpop.xlane.xlu0 %1074
      %1076 = vadd.xlane.f32.xlu0 %v1063
      %v1077 = vpop.xlane.xlu0 %1076
      %1078 = vadd.xlane.f32.xlu0 %v1064
      %v1079 = vpop.xlane.xlu0 %1078
      %1080 = vadd.xlane.f32.xlu0 %v1065
      %v1081 = vpop.xlane.xlu0 %1080
      %v1082 = vadd.f32 %v1050, %v1067
      %v1083 = vadd.f32 %v1051, %v1069
      %v1084 = vadd.f32 %v1052, %v1071
      %v1085 = vadd.f32 %v1053, %v1073
      %v1086 = vadd.f32 %v1054, %v1075
      %v1087 = vadd.f32 %v1055, %v1077
      %v1088 = vadd.f32 %v1056, %v1079
      %v1089 = vadd.f32 %v1057, %v1081
      %1090 = vst.msk [vmem:[#allocation6] sm:$0xff] %vm945, %v1082
      %1091 = vst.msk [vmem:[#allocation6 + $0x8] sm:$0xff] %vm945, %v1083
      %1092 = vst.msk [vmem:[#allocation6 + $0x10] sm:$0xff] %vm945, %v1084
      %1093 = vst.msk [vmem:[#allocation6 + $0x18] sm:$0xff] %vm945, %v1085
      %1094 = vst.msk [vmem:[#allocation6 + $0x20] sm:$0xff] %vm945, %v1086
      %1095 = vst.msk [vmem:[#allocation6 + $0x28] sm:$0xff] %vm945, %v1087
      %1096 = vst.msk [vmem:[#allocation6 + $0x30] sm:$0xff] %vm945, %v1088
      %1097 = vst.msk [vmem:[#allocation6 + $0x38] sm:$0xff] %vm945, %v1089
      %1106 = vrot.lane.b32.xlu0 %v865, 1
      %v1107 = vpop.permute.xlu0 %1106
      %1108 = vrot.lane.b32.xlu0 %v866, 1
      %v1109 = vpop.permute.xlu0 %1108
      %1110 = vrot.lane.b32.xlu0 %v867, 1
      %v1111 = vpop.permute.xlu0 %1110
      %1112 = vrot.lane.b32.xlu0 %v868, 1
      %v1113 = vpop.permute.xlu0 %1112
      %1114 = vrot.lane.b32.xlu0 %v869, 1
      %v1115 = vpop.permute.xlu0 %1114
      %1116 = vrot.lane.b32.xlu0 %v870, 1
      %v1117 = vpop.permute.xlu0 %1116
      %1118 = vrot.lane.b32.xlu0 %v871, 1
      %v1119 = vpop.permute.xlu0 %1118
      %1120 = vrot.lane.b32.xlu0 %v872, 1
      %v1121 = vpop.permute.xlu0 %1120
      %1130 = vst.msk [vmem:[#allocation2] sm:$0xff] %vm945, %v1107
      %1131 = vst.msk [vmem:[#allocation2 + $0x8] sm:$0xff] %vm945, %v1109
      %1132 = vst.msk [vmem:[#allocation2 + $0x10] sm:$0xff] %vm945, %v1111
      %1133 = vst.msk [vmem:[#allocation2 + $0x18] sm:$0xff] %vm945, %v1113
      %1134 = vst.msk [vmem:[#allocation2 + $0x20] sm:$0xff] %vm945, %v1115
      %1135 = vst.msk [vmem:[#allocation2 + $0x28] sm:$0xff] %vm945, %v1117
      %1136 = vst.msk [vmem:[#allocation2 + $0x30] sm:$0xff] %vm945, %v1119
      %1137 = vst.msk [vmem:[#allocation2 + $0x38] sm:$0xff] %vm945, %v1121
      // Predicated region
      $region41: #{tpu_custom_call.1} parent=35 // pred_check
        %p1138 = pneg %p627
      $region42: #{tpu_custom_call.1} parent=35 // pred_check_branch
        %1140 = sbr.rel (%p1138) target = $region44
      $region43: #{tpu_custom_call.1} parent=35 // pred_region
        %v1141 = vld [vmem:[#allocation2] sm:$0xff]
        %v1142 = vld [vmem:[#allocation2 + $0x8] sm:$0xff]
        %v1143 = vld [vmem:[#allocation2 + $0x10] sm:$0xff]
        %v1144 = vld [vmem:[#allocation2 + $0x18] sm:$0xff]
        %v1145 = vld [vmem:[#allocation2 + $0x20] sm:$0xff]
        %v1146 = vld [vmem:[#allocation2 + $0x28] sm:$0xff]
        %v1147 = vld [vmem:[#allocation2 + $0x30] sm:$0xff]
        %v1148 = vld [vmem:[#allocation2 + $0x38] sm:$0xff]
        %v1149 = vmin.f32 %v1141, 4.0
        %v1150 = vmin.f32 %v1142, 4.0
        %v1151 = vmin.f32 %v1143, 4.0
        %v1152 = vmin.f32 %v1144, 4.0
        %v1153 = vmin.f32 %v1145, 4.0
        %v1154 = vmin.f32 %v1146, 4.0
        %v1155 = vmin.f32 %v1147, 4.0
        %v1156 = vmin.f32 %v1148, 4.0
        %v1157 = vsub.f32 4.0, %v1149
        %v1158 = vsub.f32 4.0, %v1150
        %v1159 = vsub.f32 4.0, %v1151
        %v1160 = vsub.f32 4.0, %v1152
        %v1161 = vsub.f32 4.0, %v1153
        %v1162 = vsub.f32 4.0, %v1154
        %v1163 = vsub.f32 4.0, %v1155
        %v1164 = vsub.f32 4.0, %v1156
        %v1165 = vld [vmem:[#allocation3] sm:$0xff]
        %v1166 = vld [vmem:[#allocation3 + $0x8] sm:$0xff]
        %v1167 = vld [vmem:[#allocation3 + $0x10] sm:$0xff]
        %v1168 = vld [vmem:[#allocation3 + $0x18] sm:$0xff]
        %v1169 = vld [vmem:[#allocation3 + $0x20] sm:$0xff]
        %v1170 = vld [vmem:[#allocation3 + $0x28] sm:$0xff]
        %v1171 = vld [vmem:[#allocation3 + $0x30] sm:$0xff]
        %v1172 = vld [vmem:[#allocation3 + $0x38] sm:$0xff]
        %v1173 = vld [vmem:[#allocation5] sm:$0xff]
        %v1174 = vld [vmem:[#allocation5 + $0x8] sm:$0xff]
        %v1175 = vld [vmem:[#allocation5 + $0x10] sm:$0xff]
        %v1176 = vld [vmem:[#allocation5 + $0x18] sm:$0xff]
        %v1177 = vld [vmem:[#allocation5 + $0x20] sm:$0xff]
        %v1178 = vld [vmem:[#allocation5 + $0x28] sm:$0xff]
        %v1179 = vld [vmem:[#allocation5 + $0x30] sm:$0xff]
        %v1180 = vld [vmem:[#allocation5 + $0x38] sm:$0xff]
        %v1181 = vmul.f32 %v1157, %v1173
        %v1182 = vmul.f32 %v1158, %v1174
        %v1183 = vmul.f32 %v1159, %v1175
        %v1184 = vmul.f32 %v1160, %v1176
        %v1185 = vmul.f32 %v1161, %v1177
        %v1186 = vmul.f32 %v1162, %v1178
        %v1187 = vmul.f32 %v1163, %v1179
        %v1188 = vmul.f32 %v1164, %v1180
        %v1189 = vadd.f32 %v1165, %v1181
        %v1190 = vadd.f32 %v1166, %v1182
        %v1191 = vadd.f32 %v1167, %v1183
        %v1192 = vadd.f32 %v1168, %v1184
        %v1193 = vadd.f32 %v1169, %v1185
        %v1194 = vadd.f32 %v1170, %v1186
        %v1195 = vadd.f32 %v1171, %v1187
        %v1196 = vadd.f32 %v1172, %v1188
        %v1197 = vld [vmem:[#allocation4] sm:$0xff]
        %v1198 = vld [vmem:[#allocation4 + $0x8] sm:$0xff]
        %v1199 = vld [vmem:[#allocation4 + $0x10] sm:$0xff]
        %v1200 = vld [vmem:[#allocation4 + $0x18] sm:$0xff]
        %v1201 = vld [vmem:[#allocation4 + $0x20] sm:$0xff]
        %v1202 = vld [vmem:[#allocation4 + $0x28] sm:$0xff]
        %v1203 = vld [vmem:[#allocation4 + $0x30] sm:$0xff]
        %v1204 = vld [vmem:[#allocation4 + $0x38] sm:$0xff]
        %v1205 = vld [vmem:[#allocation6] sm:$0xff]
        %v1206 = vld [vmem:[#allocation6 + $0x8] sm:$0xff]
        %v1207 = vld [vmem:[#allocation6 + $0x10] sm:$0xff]
        %v1208 = vld [vmem:[#allocation6 + $0x18] sm:$0xff]
        %v1209 = vld [vmem:[#allocation6 + $0x20] sm:$0xff]
        %v1210 = vld [vmem:[#allocation6 + $0x28] sm:$0xff]
        %v1211 = vld [vmem:[#allocation6 + $0x30] sm:$0xff]
        %v1212 = vld [vmem:[#allocation6 + $0x38] sm:$0xff]
        %v1213 = vmul.f32 %v1157, %v1205
        %v1214 = vmul.f32 %v1158, %v1206
        %v1215 = vmul.f32 %v1159, %v1207
        %v1216 = vmul.f32 %v1160, %v1208
        %v1217 = vmul.f32 %v1161, %v1209
        %v1218 = vmul.f32 %v1162, %v1210
        %v1219 = vmul.f32 %v1163, %v1211
        %v1220 = vmul.f32 %v1164, %v1212
        %v1221 = vadd.f32 %v1197, %v1213
        %v1222 = vadd.f32 %v1198, %v1214
        %v1223 = vadd.f32 %v1199, %v1215
        %v1224 = vadd.f32 %v1200, %v1216
        %v1225 = vadd.f32 %v1201, %v1217
        %v1226 = vadd.f32 %v1202, %v1218
        %v1227 = vadd.f32 %v1203, %v1219
        %v1228 = vadd.f32 %v1204, %v1220
        %vm1229 = vcmp.gt.f32.partialorder %v1141, 0.0
        %vm1230 = vcmp.gt.f32.partialorder %v1142, 0.0
        %vm1231 = vcmp.gt.f32.partialorder %v1143, 0.0
        %vm1232 = vcmp.gt.f32.partialorder %v1144, 0.0
        %vm1233 = vcmp.gt.f32.partialorder %v1145, 0.0
        %vm1234 = vcmp.gt.f32.partialorder %v1146, 0.0
        %vm1235 = vcmp.gt.f32.partialorder %v1147, 0.0
        %vm1236 = vcmp.gt.f32.partialorder %v1148, 0.0
        %v1237 = vld [vmem:[#allocation7] sm:$0xff]
        %v1238 = vld [vmem:[#allocation7 + $0x8] sm:$0xff]
        %v1239 = vld [vmem:[#allocation7 + $0x10] sm:$0xff]
        %v1240 = vld [vmem:[#allocation7 + $0x18] sm:$0xff]
        %v1241 = vld [vmem:[#allocation7 + $0x20] sm:$0xff]
        %v1242 = vld [vmem:[#allocation7 + $0x28] sm:$0xff]
        %v1243 = vld [vmem:[#allocation7 + $0x30] sm:$0xff]
        %v1244 = vld [vmem:[#allocation7 + $0x38] sm:$0xff]
        %v1245 = vmul.f32 %v1237, 4.0
        %v1246 = vmul.f32 %v1238, 4.0
        %v1247 = vmul.f32 %v1239, 4.0
        %v1248 = vmul.f32 %v1240, 4.0
        %v1249 = vmul.f32 %v1241, 4.0
        %v1250 = vmul.f32 %v1242, 4.0
        %v1251 = vmul.f32 %v1243, 4.0
        %v1252 = vmul.f32 %v1244, 4.0
        %v1253 = vsel %vm1229, %v1189, %v1245
        %v1254 = vsel %vm1230, %v1190, %v1246
        %v1255 = vsel %vm1231, %v1191, %v1247
        %v1256 = vsel %vm1232, %v1192, %v1248
        %v1257 = vsel %vm1233, %v1193, %v1249
        %v1258 = vsel %vm1234, %v1194, %v1250
        %v1259 = vsel %vm1235, %v1195, %v1251
        %v1260 = vsel %vm1236, %v1196, %v1252
        %v1261 = vld [vmem:[#allocation8] sm:$0xff]
        %v1262 = vld [vmem:[#allocation8 + $0x8] sm:$0xff]
        %v1263 = vld [vmem:[#allocation8 + $0x10] sm:$0xff]
        %v1264 = vld [vmem:[#allocation8 + $0x18] sm:$0xff]
        %v1265 = vld [vmem:[#allocation8 + $0x20] sm:$0xff]
        %v1266 = vld [vmem:[#allocation8 + $0x28] sm:$0xff]
        %v1267 = vld [vmem:[#allocation8 + $0x30] sm:$0xff]
        %v1268 = vld [vmem:[#allocation8 + $0x38] sm:$0xff]
        %v1269 = vmul.f32 %v1261, 4.0
        %v1270 = vmul.f32 %v1262, 4.0
        %v1271 = vmul.f32 %v1263, 4.0
        %v1272 = vmul.f32 %v1264, 4.0
        %v1273 = vmul.f32 %v1265, 4.0
        %v1274 = vmul.f32 %v1266, 4.0
        %v1275 = vmul.f32 %v1267, 4.0
        %v1276 = vmul.f32 %v1268, 4.0
        %v1277 = vsel %vm1229, %v1221, %v1269
        %v1278 = vsel %vm1230, %v1222, %v1270
        %v1279 = vsel %vm1231, %v1223, %v1271
        %v1280 = vsel %vm1232, %v1224, %v1272
        %v1281 = vsel %vm1233, %v1225, %v1273
        %v1282 = vsel %vm1234, %v1226, %v1274
        %v1283 = vsel %vm1235, %v1227, %v1275
        %v1284 = vsel %vm1236, %v1228, %v1276
        %v1285 = vadd.f32 %v1277, 1e-07
        %v1286 = vadd.f32 %v1278, 1e-07
        %v1287 = vadd.f32 %v1279, 1e-07
        %v1288 = vadd.f32 %v1280, 1e-07
        %v1289 = vadd.f32 %v1281, 1e-07
        %v1290 = vadd.f32 %v1282, 1e-07
        %v1291 = vadd.f32 %v1283, 1e-07
        %v1292 = vadd.f32 %v1284, 1e-07
        %v1293 = vrcp.pop %v1285
        %v1294 = vmul.f32 %v1253, %v1293
        %v1295 = vrcp.pop %v1286
        %v1296 = vmul.f32 %v1254, %v1295
        %v1297 = vrcp.pop %v1287
        %v1298 = vmul.f32 %v1255, %v1297
        %v1299 = vrcp.pop %v1288
        %v1300 = vmul.f32 %v1256, %v1299
        %v1301 = vrcp.pop %v1289
        %v1302 = vmul.f32 %v1257, %v1301
        %v1303 = vrcp.pop %v1290
        %v1304 = vmul.f32 %v1258, %v1303
        %v1305 = vrcp.pop %v1291
        %v1306 = vmul.f32 %v1259, %v1305
        %v1307 = vrcp.pop %v1292
        %v1308 = vmul.f32 %v1260, %v1307
        %v1309 = vmul.f32 %v1294, %v1294
        %v1310 = vmul.f32 %v1296, %v1296
        %v1311 = vmul.f32 %v1298, %v1298
        %v1312 = vmul.f32 %v1300, %v1300
        %v1313 = vmul.f32 %v1302, %v1302
        %v1314 = vmul.f32 %v1304, %v1304
        %v1315 = vmul.f32 %v1306, %v1306
        %v1316 = vmul.f32 %v1308, %v1308
        %1317 = vst.msk [vmem:[%s298] sm:$0xff] %vm945, %v1309
        %1318 = vst.msk [vmem:[%s298 + $0x8] sm:$0xff] %vm945, %v1310
        %1319 = vst.msk [vmem:[%s298 + $0x10] sm:$0xff] %vm945, %v1311
        %1320 = vst.msk [vmem:[%s298 + $0x18] sm:$0xff] %vm945, %v1312
        %1321 = vst.msk [vmem:[%s298 + $0x20] sm:$0xff] %vm945, %v1313
        %1322 = vst.msk [vmem:[%s298 + $0x28] sm:$0xff] %vm945, %v1314
        %1323 = vst.msk [vmem:[%s298 + $0x30] sm:$0xff] %vm945, %v1315
        %1324 = vst.msk [vmem:[%s298 + $0x38] sm:$0xff] %vm945, %v1316
      $region44: #{tpu_custom_call.1} parent=35 // pred_fallthru
        _
      %s1325 = smul.u32 8, %s21
      %p1326 = scmp.lt.s32.totalorder %s20, 1
      %s1327 = scalar_select %p1326, %s20, 1
      %p1328 = scmp.lt.s32.totalorder %s1325, 7
      %s1329 = scalar_select %p1328, %s1325, 7
      %s1330 = smul.addr %s1327, 8
      %s1331 = sadd.s32 %s1329, %s1330
      %s1332 = smul.addr %s1331, 8
      %s1333 = scalar_lea.vmem %s4, %s1332
      // Predicated region
      $region45: #{tpu_custom_call.1} parent=35 // pred_check
        %p1334 = pneg %p159
      $region46: #{tpu_custom_call.1} parent=35 // pred_check_branch
        %1336 = sbr.rel (%p1334) target = $region48
      $region47: #{tpu_custom_call.1} parent=35 // pred_region
        %s1337 = smul.u32 8, %s21
      $region48: #{tpu_custom_call.1} parent=35 // pred_fallthru
        _
    $region36: #{tpu_custom_call.1} parent=5 // pred_fallthru
      _
    %p1338 = scmp.le.s32.totalorder 2, %s10
    // Predicated region
    $region49: #{tpu_custom_call.1} parent=5 // pred_check
      %p1339 = pneg %p1338
    $region50: #{tpu_custom_call.1} parent=5 // pred_check_branch
      %1341 = sbr.rel (%p1339) target = $region52
    $region51: #{tpu_custom_call.1} parent=5 // pred_region
      %s1342 = ssub.s32 %s10, 2
      // Predicated region
      $region53: #{tpu_custom_call.1} parent=51 // pred_check
        %p1343 = pneg %p165
      $region54: #{tpu_custom_call.1} parent=51 // pred_check_branch
        %1345 = sbr.rel (%p1343) target = $region56
      $region55: #{tpu_custom_call.1} parent=51 // pred_region
        %s1346 = smul.u32 8, %s24
        %p1347 = scmp.lt.s32.totalorder %s23, 1
        %s1348 = scalar_select %p1347, %s23, 1
        %p1349 = scmp.lt.s32.totalorder %s1346, 7
        %s1350 = scalar_select %p1349, %s1346, 7
        %s1351 = smul.addr %s1348, 8
        %s1352 = sadd.s32 %s1350, %s1351
        %s1353 = smul.addr %s1352, 8
        %s1354 = scalar_lea.vmem %s4, %s1353
      $region56: #{tpu_custom_call.1} parent=51 // pred_fallthru
        _
    $region52: #{tpu_custom_call.1} parent=5 // pred_fallthru
      _
  $region6: #{tpu_custom_call.1} parent=0 // loop_footer
    %s14 = sadd.s32 1, %s10
  $region7: #{tpu_custom_call.1} parent=0 // loop_footer_branch
    %9 = sbr.rel target = $region3
  $region8: #{tpu_custom_call.1} parent=0 // loop_exit
    _

</llo_original>
